<compile_context>
chip_gen: v7x
topology: tpu7x:2x2x1
jax: 0.10.0
libtpu: 0.0.40
codegen_flags: <defaults>
</compile_context>

<pallas_src>
import functools
import math

import jax
import jax.numpy as jnp
from jax import lax
from jax.experimental import pallas as pl
from jax.experimental.pallas import tpu as pltpu


# ----------------------------- fused Pallas kernel -----------------------------

def _wavenet_kernel(x_ref, w_in_ref, wg01_ref, wrs_ref,
                    wo1_ref, bo1_ref, wo2_ref, bo2_ref, o_ref,
                    *, block_dilations, num_blocks, res_ch, dil_ch,
                    win, halo, out_tile, compute_dtype):
    """One (batch, time-tile) grid step.

    Works on a (channels, win) window of the padded input whose last
    `out_tile` lanes are this tile's valid output; `halo` = win - out_tile >=
    sum(all dilations), and both are multiples of 128, so every lane op is
    full-width / aligned and roll wraparound never reaches the valid tail.
    """
    n_lpb = len(block_dilations)

    # 128-aligned dynamic window of the (resident) full padded input.
    start = pl.multiple_of(pl.program_id(1) * out_tile, 128)
    x_in = x_ref[0, :, pl.ds(start, win)]                         # (Cin, win) f32

    w_in = w_in_ref[...]                                          # (R, Cin)
    if x_in.shape[0] == 1:
        # degenerate Cin=1 1x1 conv -> broadcast multiply (folded input_conv)
        x = w_in.astype(jnp.float32) * x_in                       # (R, win) f32
    else:
        x = jnp.dot(w_in, x_in.astype(compute_dtype),
                    preferred_element_type=jnp.float32)

    def layer_step(l_idx, d, x, s_acc):
        wt01 = wg01_ref[l_idx]                                    # (2D, 2R): [f;g] x [tap t-d | tap t]
        wrs = wrs_ref[l_idx]                                      # (R+S, D): rows = [res ; skip]
        # tail-anchored dilation shift: x_shift[:, u] = x[:, u-d]; lanes that
        # wrap land inside the halo region and never reach the valid tail.
        x_shift = pltpu.roll(x, shift=d, axis=1)
        xx = jnp.concatenate([x_shift, x], axis=0).astype(compute_dtype)   # (2R, win)
        pre = jnp.dot(wt01, xx, preferred_element_type=jnp.float32)        # (2D, win) f32
        f = pre[:dil_ch]                                          # sublane-aligned splits
        g = pre[dil_ch:]
        # sigmoid(g) == 0.5*(tanh(0.5*g)+1): 2 tanh EUP pushes vs tanh+exp+rcp.
        gated = jnp.tanh(f) * (0.5 * (jnp.tanh(0.5 * g) + 1.0))            # (D, win) f32
        rs = jnp.dot(wrs, gated.astype(compute_dtype),
                     preferred_element_type=jnp.float32)                   # (R+S, win) f32
        x = x + rs[:res_ch]                                       # residual add (full width)
        sk = rs[res_ch:]
        s_acc = sk if s_acc is None else s_acc + sk               # skip accumulate (peeled init)
        return x, s_acc

    # Block 0: static unroll (peels the skip-accumulator init).
    s_acc = None
    for li, d in enumerate(block_dilations):
        x, s_acc = layer_step(li, d, x, s_acc)

    # Remaining blocks share the dilation pattern -> fori_loop over the block
    # index (bounds vreg live ranges / code size at production depth), inner
    # layers unrolled so every pltpu.roll shift stays static.
    if num_blocks > 1:
        def block_body(b, carry):
            xb, sb = carry
            for li, d in enumerate(block_dilations):
                xb, sb = layer_step(b * n_lpb + li, d, xb, sb)
            return (xb, sb)
        x, s_acc = lax.fori_loop(1, num_blocks, block_body, (x, s_acc))

    # Output head only on the lane-aligned valid tail (last out_tile lanes):
    # relu -> 1x1 (+bias) -> relu -> 1x1 (+bias); pointwise in time.
    h = jnp.maximum(s_acc[:, halo:], 0.0)                         # (S, out_tile)
    h = jnp.dot(wo1_ref[...], h.astype(compute_dtype),
                preferred_element_type=jnp.float32) + bo1_ref[...]
    h = jnp.maximum(h, 0.0)
    logits = jnp.dot(wo2_ref[...], h.astype(compute_dtype),
                     preferred_element_type=jnp.float32) + bo2_ref[...]
    o_ref[0] = logits                                             # lane-dense, full-block store


# ----------------------------- wrapper -----------------------------

def wavenet_forward(x_ncl, params, dilations, *, layers_per_block=None,
                    compute_dtype=jnp.bfloat16, max_tile_lanes=2048):
    N, Cin, L = x_ncl.shape
    R = params["w_in"].shape[0]
    nl, twoD, twoR = params["wg01"].shape
    D = twoD // 2
    S = params["wrs"].shape[1] - R
    E = params["w1"].shape[0]
    C = params["w2"].shape[0]
    assert nl == len(dilations) and twoR == 2 * R

    rf = int(sum(dilations))                       # receptive field - 1 (k=2 layers)
    L_final = L - rf
    assert L_final > 0, "input shorter than receptive field"

    # Detect a repeating per-block dilation pattern (enables in-kernel fori).
    block_dils, num_blocks = tuple(dilations), 1
    if layers_per_block and nl % layers_per_block == 0:
        cand = tuple(dilations[:layers_per_block])
        if tuple(dilations) == cand * (nl // layers_per_block):
            block_dils, num_blocks = cand, nl // layers_per_block

    # Lane geometry: output padded to a 128 multiple (valid samples tail-
    # anchored), halo = receptive field rounded up to 128 lanes, input padded
    # on the LEFT to lout_pad + halo so every window / slice / store start is
    # a multiple of 128 and roll-wrap never reaches a valid lane.
    lout_pad = int(pl.cdiv(L_final, 128)) * 128
    halo = int(pl.cdiv(rf, 128)) * 128
    lb = lout_pad + halo
    assert halo >= rf and lb >= L                  # roll-wrap / halo safety

    # Time tile: largest 128-multiple divisor of lout_pad <= max_tile_lanes.
    m = lout_pad // 128
    cap = max(1, int(max_tile_lanes) // 128)
    k = max(d for d in range(1, min(m, cap) + 1) if m % d == 0)
    out_tile = 128 * k
    num_tiles = lout_pad // out_tile
    win = out_tile + halo

    x_pad = jnp.pad(x_ncl.astype(jnp.float32), ((0, 0), (0, 0), (lb - L, 0)))

    cdt = compute_dtype
    kernel = functools.partial(
        _wavenet_kernel, block_dilations=block_dils, num_blocks=num_blocks,
        res_ch=R, dil_ch=D, win=win, halo=halo, out_tile=out_tile,
        compute_dtype=cdt)

    out_pad = pl.pallas_call(
        kernel,
        out_shape=jax.ShapeDtypeStruct((N, C, lout_pad), jnp.float32),
        grid=(N, num_tiles),
        in_specs=[
            pl.BlockSpec((1, Cin, lb), lambda n, t: (n, 0, 0)),        # padded input (resident per n)
            pl.BlockSpec((R, Cin), lambda n, t: (0, 0)),               # input 1x1 conv
            pl.BlockSpec((nl, 2 * D, 2 * R), lambda n, t: (0, 0, 0)),  # fused taps [f;g] x [t-d | t]
            pl.BlockSpec((nl, R + S, D), lambda n, t: (0, 0, 0)),      # fused [res ; skip] 1x1
            pl.BlockSpec((E, S), lambda n, t: (0, 0)),                 # head conv 1
            pl.BlockSpec((E, 1), lambda n, t: (0, 0)),
            pl.BlockSpec((C, E), lambda n, t: (0, 0)),                 # head conv 2
            pl.BlockSpec((C, 1), lambda n, t: (0, 0)),
        ],
        out_specs=pl.BlockSpec((1, C, out_tile), lambda n, t: (n, 0, t)),
        compiler_params=pltpu.CompilerParams(
            dimension_semantics=("parallel", "parallel"),
            vmem_limit_bytes=48 * 1024 * 1024),
    )(x_pad,
      params["w_in"].astype(cdt if Cin > 1 else jnp.float32),
      params["wg01"].astype(cdt), params["wrs"].astype(cdt),
      params["w1"].astype(cdt), params["b1"].astype(jnp.float32),
      params["w2"].astype(cdt), params["b2"].astype(jnp.float32))

    # Trim the lane-dense padded output back to the valid length (plain XLA slice).
    return out_pad[:, :, lout_pad - L_final:]


# ----------------------- parameter packing (PyTorch layout -> kernel layout) -----------------------

def pack_params(raw):
    """raw: PyTorch Conv1d layouts — weights (out, in, k), biases (out,)."""
    wg01 = jnp.stack([jnp.concatenate([w[:, :, 0], w[:, :, 1]], axis=1)
                      for w in raw["layer_conv_w"]])                       # (nl, 2D, 2R)
    wrs = jnp.stack([jnp.concatenate([rw[:, :, 0], sw[:, :, 0]], axis=0)
                     for rw, sw in zip(raw["layer_res_w"], raw["layer_skip_w"])])  # (nl, R+S, D)
    return {
        "w_in": raw["w_input"][:, :, 0],                                   # (R, Cin)
        "wg01": wg01,
        "wrs": wrs,
        "w1": raw["w_out1"][:, :, 0], "b1": raw["b_out1"][:, None],
        "w2": raw["w_out2"][:, :, 0], "b2": raw["b_out2"][:, None],
    }


# ------------- pure-JAX reference (literal PyTorch dilate/undilate mirror, NCL) -------------

def _ref_dilate(x, d):
    if d == 1:
        return x, 0
    N, C, L = x.shape
    new_L = int(math.ceil(L / d) * d)
    p = new_L - L
    if p:
        x = jnp.pad(x, ((0, 0), (0, 0), (p, 0)))
    x = jnp.transpose(x, (1, 2, 0)).reshape(C, new_L // d, N * d)
    return jnp.transpose(x, (2, 0, 1)), p


def _ref_undilate(x, d, left_unpad, symm_unpad):
    Nd, C, Lz = x.shape
    x = jnp.transpose(x, (1, 2, 0)).reshape(C, Lz * d, Nd // d)
    x = jnp.transpose(x, (2, 0, 1))
    start = left_unpad + symm_unpad
    length = Lz * d - left_unpad - 2 * symm_unpad
    return x[:, :, start:start + length]


def _ref_pw(x_ncl, w_oc):   # pointwise conv, weight layout (out, in)
    return jnp.einsum("ncl,oc->nol", x_ncl, w_oc, precision="highest")


def ref_wavenet(x_ncl, raw, dilations):
    D = raw["layer_conv_w"][0].shape[0] // 2
    x = _ref_pw(x_ncl, raw["w_input"][:, :, 0])
    skip = None
    for l, d in enumerate(dilations):
        xd, p = _ref_dilate(x, d)
        wc = raw["layer_conv_w"][l]
        pre = (_ref_pw(xd[:, :, :-1], wc[:, :, 0])
               + _ref_pw(xd[:, :, 1:], wc[:, :, 1]))
        f, g = pre[:, :D], pre[:, D:]
        gated = jnp.tanh(f) * jax.nn.sigmoid(g)
        res = _ref_pw(gated, raw["layer_res_w"][l][:, :, 0])
        sk = _ref_pw(gated, raw["layer_skip_w"][l][:, :, 0])
        xd = xd[:, :, xd.shape[2] - res.shape[2]:] + res
        x = _ref_undilate(xd, d, p, 0)
        s = _ref_undilate(sk, d, p, 0)
        skip = s if skip is None else s + skip[:, :, skip.shape[2] - s.shape[2]:]
    h = jax.nn.relu(skip)
    h = _ref_pw(h, raw["w_out1"][:, :, 0]) + raw["b_out1"][None, :, None]
    h = jax.nn.relu(h)
    h = _ref_pw(h, raw["w_out2"][:, :, 0]) + raw["b_out2"][None, :, None]
    return h


# ----------------------------- demo -----------------------------

if __name__ == "__main__":
    # Small WaveNet config (module defaults scaled down).
    layers, blocks = 3, 2
    in_channels = 1
    residual_channels = 8
    dilation_channels = 8
    skip_channels = 16
    end_channels = 16
    classes = 16
    N = 2

    dilations = []
    for _b in range(blocks):
        d = 1
        for _l in range(layers):
            dilations.append(d)
            d *= 2

    key = jax.random.PRNGKey(0)
    keys = iter(jax.random.split(key, 64))

    def nrm(shape, scale=0.25):
        return (scale * jax.random.normal(next(keys), shape)).astype(jnp.float32)

    # PyTorch-layout parameters (Conv1d weight = (out, in, k)).
    raw = {
        "w_input": nrm((residual_channels, in_channels, 1)),                 # input_conv (bias=False)
        "layer_conv_w": [nrm((2 * dilation_channels, residual_channels, 2))  # gated (f;g), k=2
                         for _ in dilations],
        "layer_res_w": [nrm((residual_channels, dilation_channels, 1))       # resd_conv 1x1
                        for _ in dilations],
        "layer_skip_w": [nrm((skip_channels, dilation_channels, 1))          # skip_conv 1x1
                         for _ in dilations],
        "w_out1": nrm((end_channels, skip_channels, 1)),                     # output_conv[0]
        "b_out1": nrm((end_channels,), 0.05),
        "w_out2": nrm((classes, end_channels, 1)),                           # output_conv[2]
        "b_out2": nrm((classes,), 0.05),
    }
    params = pack_params(raw)

    def check(L, max_tile_lanes):
        x_ncl = jax.random.normal(next(keys), (N, in_channels, L), dtype=jnp.float32)
        out = jax.block_until_ready(
            wavenet_forward(x_ncl, params, dilations,
                            layers_per_block=layers,
                            compute_dtype=jnp.bfloat16,
                            max_tile_lanes=max_tile_lanes))
        ref = ref_wavenet(x_ncl, raw, dilations)
        expected = (N, classes, L - sum(dilations))
        assert out.shape == ref.shape == expected, (out.shape, ref.shape, expected)
        err = float(jnp.max(jnp.abs(out - ref)))
        tol = 5e-2 * (1.0 + float(jnp.max(jnp.abs(ref))))   # bf16 matmul operands
        assert err < tol, f"mismatch vs reference: {err} (tol {tol})"

    # Single-tile path (L short) and multi-time-tile path (halo correctness).
    check(L=24, max_tile_lanes=2048)
    check(L=300, max_tile_lanes=128)

    print("KERNEL_OK")
</pallas_src>

<mosaic_0001>
module attributes {stable_mosaic.version = 11 : i64} {
  func.func @_wavenet_kernel(%arg0: i32, %arg1: i32, %arg2: memref<1x1x256xf32, #tpu.memory_space<vmem>>, %arg3: memref<8x1xf32, #tpu.memory_space<vmem>>, %arg4: memref<6x16x16xbf16, #tpu.memory_space<vmem>>, %arg5: memref<6x24x8xbf16, #tpu.memory_space<vmem>>, %arg6: memref<16x16xbf16, #tpu.memory_space<vmem>>, %arg7: memref<16x1xf32, #tpu.memory_space<vmem>>, %arg8: memref<16x16xbf16, #tpu.memory_space<vmem>>, %arg9: memref<16x1xf32, #tpu.memory_space<vmem>>, %arg10: memref<1x16x128xf32, #tpu.memory_space<vmem>>) attributes {dimension_semantics = [#tpu.dimension_semantics<parallel>, #tpu.dimension_semantics<parallel>], iteration_bounds = array<i64: 2, 1>, scalar_prefetch = 0 : i64, scratch_operands = 0 : i64, tpu.core_type = #tpu.core_type<tc>, window_params = [{transform_indices = @transform_0, window_bounds = array<i64: 1, 1, 256>}, {pipeline_mode = #tpu.pipeline_mode<synchronous>, transform_indices = @transform_1, window_bounds = array<i64: 8, 1>}, {pipeline_mode = #tpu.pipeline_mode<synchronous>, transform_indices = @transform_2, window_bounds = array<i64: 6, 16, 16>}, {pipeline_mode = #tpu.pipeline_mode<synchronous>, transform_indices = @transform_3, window_bounds = array<i64: 6, 24, 8>}, {pipeline_mode = #tpu.pipeline_mode<synchronous>, transform_indices = @transform_4, window_bounds = array<i64: 16, 16>}, {pipeline_mode = #tpu.pipeline_mode<synchronous>, transform_indices = @transform_5, window_bounds = array<i64: 16, 1>}, {pipeline_mode = #tpu.pipeline_mode<synchronous>, transform_indices = @transform_6, window_bounds = array<i64: 16, 16>}, {pipeline_mode = #tpu.pipeline_mode<synchronous>, transform_indices = @transform_7, window_bounds = array<i64: 16, 1>}, {transform_indices = @transform_8, window_bounds = array<i64: 1, 16, 128>}]} {
    %c128_i32 = arith.constant 128 : i32
    %0 = arith.muli %arg1, %c128_i32 : i32
    %1 = tpu.assume_multiple %0, 128 : i32
    %c0 = arith.constant 0 : index
    %c0_0 = arith.constant 0 : index
    %2 = arith.index_cast %1 : i32 to index
    %3 = vector.load %arg2[%c0, %c0_0, %2] : memref<1x1x256xf32, #tpu.memory_space<vmem>>, vector<1x1x256xf32>
    %4 = vector.shape_cast %3 : vector<1x1x256xf32> to vector<1x256xf32>
    %c0_1 = arith.constant 0 : index
    %c0_2 = arith.constant 0 : index
    %5 = vector.load %arg3[%c0_1, %c0_2] : memref<8x1xf32, #tpu.memory_space<vmem>>, vector<8x1xf32>
    %6 = vector.broadcast %5 : vector<8x1xf32> to vector<8x256xf32>
    %7 = vector.broadcast %4 : vector<1x256xf32> to vector<8x256xf32>
    %8 = arith.mulf %6, %7 : vector<8x256xf32>
    %c0_3 = arith.constant 0 : index
    %c0_4 = arith.constant 0 : index
    %c0_5 = arith.constant 0 : index
    %9 = vector.load %arg4[%c0_3, %c0_4, %c0_5] : memref<6x16x16xbf16, #tpu.memory_space<vmem>>, vector<1x16x16xbf16>
    %10 = vector.shape_cast %9 : vector<1x16x16xbf16> to vector<16x16xbf16>
    %c0_6 = arith.constant 0 : index
    %c0_7 = arith.constant 0 : index
    %c0_8 = arith.constant 0 : index
    %11 = vector.load %arg5[%c0_6, %c0_7, %c0_8] : memref<6x24x8xbf16, #tpu.memory_space<vmem>>, vector<1x24x8xbf16>
    %12 = vector.shape_cast %11 : vector<1x24x8xbf16> to vector<24x8xbf16>
    %c1_i32 = arith.constant 1 : i32
    %13 = tpu.dynamic_rotate %8 by %c1_i32 dim 1 : vector<8x256xf32>, i32 -> vector<8x256xf32>
    %14 = tpu.concatenate %13, %8 in 0 : vector<8x256xf32>, vector<8x256xf32> -> vector<16x256xf32>
    %15 = arith.truncf %14 : vector<16x256xf32> to vector<16x256xbf16>
    %cst = arith.constant dense<0.000000e+00> : vector<16x256xf32>
    %16 = tpu.matmul %10, %15, %cst {dimension_numbers = #tpu.dot_dimension_numbers<[1], [0], [0], [1], [0, 0, 1, 1], [], []>} : vector<16x16xbf16>, vector<16x256xbf16>, vector<16x256xf32> -> vector<16x256xf32>
    %17 = vector.extract_strided_slice %16 {offsets = [0, 0], sizes = [8, 256], strides = [1, 1]} : vector<16x256xf32> to vector<8x256xf32>
    %18 = vector.extract_strided_slice %16 {offsets = [8, 0], sizes = [8, 256], strides = [1, 1]} : vector<16x256xf32> to vector<8x256xf32>
    %19 = math.tanh %17 : vector<8x256xf32>
    %cst_9 = arith.constant 5.000000e-01 : f32
    %20 = vector.broadcast %cst_9 : f32 to vector<8x256xf32>
    %21 = arith.mulf %20, %18 : vector<8x256xf32>
    %22 = math.tanh %21 : vector<8x256xf32>
    %cst_10 = arith.constant 1.000000e+00 : f32
    %23 = vector.broadcast %cst_10 : f32 to vector<8x256xf32>
    %24 = arith.addf %22, %23 : vector<8x256xf32>
    %cst_11 = arith.constant 5.000000e-01 : f32
    %25 = vector.broadcast %cst_11 : f32 to vector<8x256xf32>
    %26 = arith.mulf %25, %24 : vector<8x256xf32>
    %27 = arith.mulf %19, %26 : vector<8x256xf32>
    %28 = arith.truncf %27 : vector<8x256xf32> to vector<8x256xbf16>
    %cst_12 = arith.constant dense<0.000000e+00> : vector<24x256xf32>
    %29 = tpu.matmul %12, %28, %cst_12 {dimension_numbers = #tpu.dot_dimension_numbers<[1], [0], [0], [1], [0, 0, 1, 1], [], []>} : vector<24x8xbf16>, vector<8x256xbf16>, vector<24x256xf32> -> vector<24x256xf32>
    %30 = vector.extract_strided_slice %29 {offsets = [0, 0], sizes = [8, 256], strides = [1, 1]} : vector<24x256xf32> to vector<8x256xf32>
    %31 = arith.addf %8, %30 : vector<8x256xf32>
    %32 = vector.extract_strided_slice %29 {offsets = [8, 0], sizes = [16, 256], strides = [1, 1]} : vector<24x256xf32> to vector<16x256xf32>
    %c1 = arith.constant 1 : index
    %c0_13 = arith.constant 0 : index
    %c0_14 = arith.constant 0 : index
    %33 = vector.load %arg4[%c1, %c0_13, %c0_14] : memref<6x16x16xbf16, #tpu.memory_space<vmem>>, vector<1x16x16xbf16>
    %34 = vector.shape_cast %33 : vector<1x16x16xbf16> to vector<16x16xbf16>
    %c1_15 = arith.constant 1 : index
    %c0_16 = arith.constant 0 : index
    %c0_17 = arith.constant 0 : index
    %35 = vector.load %arg5[%c1_15, %c0_16, %c0_17] : memref<6x24x8xbf16, #tpu.memory_space<vmem>>, vector<1x24x8xbf16>
    %36 = vector.shape_cast %35 : vector<1x24x8xbf16> to vector<24x8xbf16>
    %c2_i32 = arith.constant 2 : i32
    %37 = tpu.dynamic_rotate %31 by %c2_i32 dim 1 : vector<8x256xf32>, i32 -> vector<8x256xf32>
    %38 = tpu.concatenate %37, %31 in 0 : vector<8x256xf32>, vector<8x256xf32> -> vector<16x256xf32>
    %39 = arith.truncf %38 : vector<16x256xf32> to vector<16x256xbf16>
    %cst_18 = arith.constant dense<0.000000e+00> : vector<16x256xf32>
    %40 = tpu.matmul %34, %39, %cst_18 {dimension_numbers = #tpu.dot_dimension_numbers<[1], [0], [0], [1], [0, 0, 1, 1], [], []>} : vector<16x16xbf16>, vector<16x256xbf16>, vector<16x256xf32> -> vector<16x256xf32>
    %41 = vector.extract_strided_slice %40 {offsets = [0, 0], sizes = [8, 256], strides = [1, 1]} : vector<16x256xf32> to vector<8x256xf32>
    %42 = vector.extract_strided_slice %40 {offsets = [8, 0], sizes = [8, 256], strides = [1, 1]} : vector<16x256xf32> to vector<8x256xf32>
    %43 = math.tanh %41 : vector<8x256xf32>
    %cst_19 = arith.constant 5.000000e-01 : f32
    %44 = vector.broadcast %cst_19 : f32 to vector<8x256xf32>
    %45 = arith.mulf %44, %42 : vector<8x256xf32>
    %46 = math.tanh %45 : vector<8x256xf32>
    %cst_20 = arith.constant 1.000000e+00 : f32
    %47 = vector.broadcast %cst_20 : f32 to vector<8x256xf32>
    %48 = arith.addf %46, %47 : vector<8x256xf32>
    %cst_21 = arith.constant 5.000000e-01 : f32
    %49 = vector.broadcast %cst_21 : f32 to vector<8x256xf32>
    %50 = arith.mulf %49, %48 : vector<8x256xf32>
    %51 = arith.mulf %43, %50 : vector<8x256xf32>
    %52 = arith.truncf %51 : vector<8x256xf32> to vector<8x256xbf16>
    %cst_22 = arith.constant dense<0.000000e+00> : vector<24x256xf32>
    %53 = tpu.matmul %36, %52, %cst_22 {dimension_numbers = #tpu.dot_dimension_numbers<[1], [0], [0], [1], [0, 0, 1, 1], [], []>} : vector<24x8xbf16>, vector<8x256xbf16>, vector<24x256xf32> -> vector<24x256xf32>
    %54 = vector.extract_strided_slice %53 {offsets = [0, 0], sizes = [8, 256], strides = [1, 1]} : vector<24x256xf32> to vector<8x256xf32>
    %55 = arith.addf %31, %54 : vector<8x256xf32>
    %56 = vector.extract_strided_slice %53 {offsets = [8, 0], sizes = [16, 256], strides = [1, 1]} : vector<24x256xf32> to vector<16x256xf32>
    %57 = arith.addf %32, %56 : vector<16x256xf32>
    %c2 = arith.constant 2 : index
    %c0_23 = arith.constant 0 : index
    %c0_24 = arith.constant 0 : index
    %58 = vector.load %arg4[%c2, %c0_23, %c0_24] : memref<6x16x16xbf16, #tpu.memory_space<vmem>>, vector<1x16x16xbf16>
    %59 = vector.shape_cast %58 : vector<1x16x16xbf16> to vector<16x16xbf16>
    %c2_25 = arith.constant 2 : index
    %c0_26 = arith.constant 0 : index
    %c0_27 = arith.constant 0 : index
    %60 = vector.load %arg5[%c2_25, %c0_26, %c0_27] : memref<6x24x8xbf16, #tpu.memory_space<vmem>>, vector<1x24x8xbf16>
    %61 = vector.shape_cast %60 : vector<1x24x8xbf16> to vector<24x8xbf16>
    %c4_i32 = arith.constant 4 : i32
    %62 = tpu.dynamic_rotate %55 by %c4_i32 dim 1 : vector<8x256xf32>, i32 -> vector<8x256xf32>
    %63 = tpu.concatenate %62, %55 in 0 : vector<8x256xf32>, vector<8x256xf32> -> vector<16x256xf32>
    %64 = arith.truncf %63 : vector<16x256xf32> to vector<16x256xbf16>
    %cst_28 = arith.constant dense<0.000000e+00> : vector<16x256xf32>
    %65 = tpu.matmul %59, %64, %cst_28 {dimension_numbers = #tpu.dot_dimension_numbers<[1], [0], [0], [1], [0, 0, 1, 1], [], []>} : vector<16x16xbf16>, vector<16x256xbf16>, vector<16x256xf32> -> vector<16x256xf32>
    %66 = vector.extract_strided_slice %65 {offsets = [0, 0], sizes = [8, 256], strides = [1, 1]} : vector<16x256xf32> to vector<8x256xf32>
    %67 = vector.extract_strided_slice %65 {offsets = [8, 0], sizes = [8, 256], strides = [1, 1]} : vector<16x256xf32> to vector<8x256xf32>
    %68 = math.tanh %66 : vector<8x256xf32>
    %cst_29 = arith.constant 5.000000e-01 : f32
    %69 = vector.broadcast %cst_29 : f32 to vector<8x256xf32>
    %70 = arith.mulf %69, %67 : vector<8x256xf32>
    %71 = math.tanh %70 : vector<8x256xf32>
    %cst_30 = arith.constant 1.000000e+00 : f32
    %72 = vector.broadcast %cst_30 : f32 to vector<8x256xf32>
    %73 = arith.addf %71, %72 : vector<8x256xf32>
    %cst_31 = arith.constant 5.000000e-01 : f32
    %74 = vector.broadcast %cst_31 : f32 to vector<8x256xf32>
    %75 = arith.mulf %74, %73 : vector<8x256xf32>
    %76 = arith.mulf %68, %75 : vector<8x256xf32>
    %77 = arith.truncf %76 : vector<8x256xf32> to vector<8x256xbf16>
    %cst_32 = arith.constant dense<0.000000e+00> : vector<24x256xf32>
    %78 = tpu.matmul %61, %77, %cst_32 {dimension_numbers = #tpu.dot_dimension_numbers<[1], [0], [0], [1], [0, 0, 1, 1], [], []>} : vector<24x8xbf16>, vector<8x256xbf16>, vector<24x256xf32> -> vector<24x256xf32>
    %79 = vector.extract_strided_slice %78 {offsets = [0, 0], sizes = [8, 256], strides = [1, 1]} : vector<24x256xf32> to vector<8x256xf32>
    %80 = arith.addf %55, %79 : vector<8x256xf32>
    %81 = vector.extract_strided_slice %78 {offsets = [8, 0], sizes = [16, 256], strides = [1, 1]} : vector<24x256xf32> to vector<16x256xf32>
    %82 = arith.addf %57, %81 : vector<16x256xf32>
    %c1_i32_33 = arith.constant 1 : i32
    %c3_i32 = arith.constant 3 : i32
    %83 = arith.muli %c1_i32_33, %c3_i32 : i32
    %c0_i32 = arith.constant 0 : i32
    %84 = arith.addi %83, %c0_i32 : i32
    %85 = arith.index_cast %84 : i32 to index
    %c0_34 = arith.constant 0 : index
    %c0_35 = arith.constant 0 : index
    %86 = vector.load %arg4[%85, %c0_34, %c0_35] : memref<6x16x16xbf16, #tpu.memory_space<vmem>>, vector<1x16x16xbf16>
    %87 = vector.shape_cast %86 : vector<1x16x16xbf16> to vector<16x16xbf16>
    %88 = arith.index_cast %84 : i32 to index
    %c0_36 = arith.constant 0 : index
    %c0_37 = arith.constant 0 : index
    %89 = vector.load %arg5[%88, %c0_36, %c0_37] : memref<6x24x8xbf16, #tpu.memory_space<vmem>>, vector<1x24x8xbf16>
    %90 = vector.shape_cast %89 : vector<1x24x8xbf16> to vector<24x8xbf16>
    %c1_i32_38 = arith.constant 1 : i32
    %91 = tpu.dynamic_rotate %80 by %c1_i32_38 dim 1 : vector<8x256xf32>, i32 -> vector<8x256xf32>
    %92 = tpu.concatenate %91, %80 in 0 : vector<8x256xf32>, vector<8x256xf32> -> vector<16x256xf32>
    %93 = arith.truncf %92 : vector<16x256xf32> to vector<16x256xbf16>
    %cst_39 = arith.constant dense<0.000000e+00> : vector<16x256xf32>
    %94 = tpu.matmul %87, %93, %cst_39 {dimension_numbers = #tpu.dot_dimension_numbers<[1], [0], [0], [1], [0, 0, 1, 1], [], []>} : vector<16x16xbf16>, vector<16x256xbf16>, vector<16x256xf32> -> vector<16x256xf32>
    %95 = vector.extract_strided_slice %94 {offsets = [0, 0], sizes = [8, 256], strides = [1, 1]} : vector<16x256xf32> to vector<8x256xf32>
    %96 = vector.extract_strided_slice %94 {offsets = [8, 0], sizes = [8, 256], strides = [1, 1]} : vector<16x256xf32> to vector<8x256xf32>
    %97 = math.tanh %95 : vector<8x256xf32>
    %cst_40 = arith.constant 5.000000e-01 : f32
    %98 = vector.broadcast %cst_40 : f32 to vector<8x256xf32>
    %99 = arith.mulf %98, %96 : vector<8x256xf32>
    %100 = math.tanh %99 : vector<8x256xf32>
    %cst_41 = arith.constant 1.000000e+00 : f32
    %101 = vector.broadcast %cst_41 : f32 to vector<8x256xf32>
    %102 = arith.addf %100, %101 : vector<8x256xf32>
    %cst_42 = arith.constant 5.000000e-01 : f32
    %103 = vector.broadcast %cst_42 : f32 to vector<8x256xf32>
    %104 = arith.mulf %103, %102 : vector<8x256xf32>
    %105 = arith.mulf %97, %104 : vector<8x256xf32>
    %106 = arith.truncf %105 : vector<8x256xf32> to vector<8x256xbf16>
    %cst_43 = arith.constant dense<0.000000e+00> : vector<24x256xf32>
    %107 = tpu.matmul %90, %106, %cst_43 {dimension_numbers = #tpu.dot_dimension_numbers<[1], [0], [0], [1], [0, 0, 1, 1], [], []>} : vector<24x8xbf16>, vector<8x256xbf16>, vector<24x256xf32> -> vector<24x256xf32>
    %108 = vector.extract_strided_slice %107 {offsets = [0, 0], sizes = [8, 256], strides = [1, 1]} : vector<24x256xf32> to vector<8x256xf32>
    %109 = arith.addf %80, %108 : vector<8x256xf32>
    %110 = vector.extract_strided_slice %107 {offsets = [8, 0], sizes = [16, 256], strides = [1, 1]} : vector<24x256xf32> to vector<16x256xf32>
    %111 = arith.addf %82, %110 : vector<16x256xf32>
    %c3_i32_44 = arith.constant 3 : i32
    %112 = arith.muli %c1_i32_33, %c3_i32_44 : i32
    %c1_i32_45 = arith.constant 1 : i32
    %113 = arith.addi %112, %c1_i32_45 : i32
    %114 = arith.index_cast %113 : i32 to index
    %c0_46 = arith.constant 0 : index
    %c0_47 = arith.constant 0 : index
    %115 = vector.load %arg4[%114, %c0_46, %c0_47] : memref<6x16x16xbf16, #tpu.memory_space<vmem>>, vector<1x16x16xbf16>
    %116 = vector.shape_cast %115 : vector<1x16x16xbf16> to vector<16x16xbf16>
    %117 = arith.index_cast %113 : i32 to index
    %c0_48 = arith.constant 0 : index
    %c0_49 = arith.constant 0 : index
    %118 = vector.load %arg5[%117, %c0_48, %c0_49] : memref<6x24x8xbf16, #tpu.memory_space<vmem>>, vector<1x24x8xbf16>
    %119 = vector.shape_cast %118 : vector<1x24x8xbf16> to vector<24x8xbf16>
    %c2_i32_50 = arith.constant 2 : i32
    %120 = tpu.dynamic_rotate %109 by %c2_i32_50 dim 1 : vector<8x256xf32>, i32 -> vector<8x256xf32>
    %121 = tpu.concatenate %120, %109 in 0 : vector<8x256xf32>, vector<8x256xf32> -> vector<16x256xf32>
    %122 = arith.truncf %121 : vector<16x256xf32> to vector<16x256xbf16>
    %cst_51 = arith.constant dense<0.000000e+00> : vector<16x256xf32>
    %123 = tpu.matmul %116, %122, %cst_51 {dimension_numbers = #tpu.dot_dimension_numbers<[1], [0], [0], [1], [0, 0, 1, 1], [], []>} : vector<16x16xbf16>, vector<16x256xbf16>, vector<16x256xf32> -> vector<16x256xf32>
    %124 = vector.extract_strided_slice %123 {offsets = [0, 0], sizes = [8, 256], strides = [1, 1]} : vector<16x256xf32> to vector<8x256xf32>
    %125 = vector.extract_strided_slice %123 {offsets = [8, 0], sizes = [8, 256], strides = [1, 1]} : vector<16x256xf32> to vector<8x256xf32>
    %126 = math.tanh %124 : vector<8x256xf32>
    %cst_52 = arith.constant 5.000000e-01 : f32
    %127 = vector.broadcast %cst_52 : f32 to vector<8x256xf32>
    %128 = arith.mulf %127, %125 : vector<8x256xf32>
    %129 = math.tanh %128 : vector<8x256xf32>
    %cst_53 = arith.constant 1.000000e+00 : f32
    %130 = vector.broadcast %cst_53 : f32 to vector<8x256xf32>
    %131 = arith.addf %129, %130 : vector<8x256xf32>
    %cst_54 = arith.constant 5.000000e-01 : f32
    %132 = vector.broadcast %cst_54 : f32 to vector<8x256xf32>
    %133 = arith.mulf %132, %131 : vector<8x256xf32>
    %134 = arith.mulf %126, %133 : vector<8x256xf32>
    %135 = arith.truncf %134 : vector<8x256xf32> to vector<8x256xbf16>
    %cst_55 = arith.constant dense<0.000000e+00> : vector<24x256xf32>
    %136 = tpu.matmul %119, %135, %cst_55 {dimension_numbers = #tpu.dot_dimension_numbers<[1], [0], [0], [1], [0, 0, 1, 1], [], []>} : vector<24x8xbf16>, vector<8x256xbf16>, vector<24x256xf32> -> vector<24x256xf32>
    %137 = vector.extract_strided_slice %136 {offsets = [0, 0], sizes = [8, 256], strides = [1, 1]} : vector<24x256xf32> to vector<8x256xf32>
    %138 = arith.addf %109, %137 : vector<8x256xf32>
    %139 = vector.extract_strided_slice %136 {offsets = [8, 0], sizes = [16, 256], strides = [1, 1]} : vector<24x256xf32> to vector<16x256xf32>
    %140 = arith.addf %111, %139 : vector<16x256xf32>
    %c3_i32_56 = arith.constant 3 : i32
    %141 = arith.muli %c1_i32_33, %c3_i32_56 : i32
    %c2_i32_57 = arith.constant 2 : i32
    %142 = arith.addi %141, %c2_i32_57 : i32
    %143 = arith.index_cast %142 : i32 to index
    %c0_58 = arith.constant 0 : index
    %c0_59 = arith.constant 0 : index
    %144 = vector.load %arg4[%143, %c0_58, %c0_59] : memref<6x16x16xbf16, #tpu.memory_space<vmem>>, vector<1x16x16xbf16>
    %145 = vector.shape_cast %144 : vector<1x16x16xbf16> to vector<16x16xbf16>
    %146 = arith.index_cast %142 : i32 to index
    %c0_60 = arith.constant 0 : index
    %c0_61 = arith.constant 0 : index
    %147 = vector.load %arg5[%146, %c0_60, %c0_61] : memref<6x24x8xbf16, #tpu.memory_space<vmem>>, vector<1x24x8xbf16>
    %148 = vector.shape_cast %147 : vector<1x24x8xbf16> to vector<24x8xbf16>
    %c4_i32_62 = arith.constant 4 : i32
    %149 = tpu.dynamic_rotate %138 by %c4_i32_62 dim 1 : vector<8x256xf32>, i32 -> vector<8x256xf32>
    %150 = tpu.concatenate %149, %138 in 0 : vector<8x256xf32>, vector<8x256xf32> -> vector<16x256xf32>
    %151 = arith.truncf %150 : vector<16x256xf32> to vector<16x256xbf16>
    %cst_63 = arith.constant dense<0.000000e+00> : vector<16x256xf32>
    %152 = tpu.matmul %145, %151, %cst_63 {dimension_numbers = #tpu.dot_dimension_numbers<[1], [0], [0], [1], [0, 0, 1, 1], [], []>} : vector<16x16xbf16>, vector<16x256xbf16>, vector<16x256xf32> -> vector<16x256xf32>
    %153 = vector.extract_strided_slice %152 {offsets = [0, 0], sizes = [8, 256], strides = [1, 1]} : vector<16x256xf32> to vector<8x256xf32>
    %154 = vector.extract_strided_slice %152 {offsets = [8, 0], sizes = [8, 256], strides = [1, 1]} : vector<16x256xf32> to vector<8x256xf32>
    %155 = math.tanh %153 : vector<8x256xf32>
    %cst_64 = arith.constant 5.000000e-01 : f32
    %156 = vector.broadcast %cst_64 : f32 to vector<8x256xf32>
    %157 = arith.mulf %156, %154 : vector<8x256xf32>
    %158 = math.tanh %157 : vector<8x256xf32>
    %cst_65 = arith.constant 1.000000e+00 : f32
    %159 = vector.broadcast %cst_65 : f32 to vector<8x256xf32>
    %160 = arith.addf %158, %159 : vector<8x256xf32>
    %cst_66 = arith.constant 5.000000e-01 : f32
    %161 = vector.broadcast %cst_66 : f32 to vector<8x256xf32>
    %162 = arith.mulf %161, %160 : vector<8x256xf32>
    %163 = arith.mulf %155, %162 : vector<8x256xf32>
    %164 = arith.truncf %163 : vector<8x256xf32> to vector<8x256xbf16>
    %cst_67 = arith.constant dense<0.000000e+00> : vector<24x256xf32>
    %165 = tpu.matmul %148, %164, %cst_67 {dimension_numbers = #tpu.dot_dimension_numbers<[1], [0], [0], [1], [0, 0, 1, 1], [], []>} : vector<24x8xbf16>, vector<8x256xbf16>, vector<24x256xf32> -> vector<24x256xf32>
    %166 = vector.extract_strided_slice %165 {offsets = [0, 0], sizes = [8, 256], strides = [1, 1]} : vector<24x256xf32> to vector<8x256xf32>
    %167 = arith.addf %138, %166 : vector<8x256xf32>
    %168 = vector.extract_strided_slice %165 {offsets = [8, 0], sizes = [16, 256], strides = [1, 1]} : vector<24x256xf32> to vector<16x256xf32>
    %169 = arith.addf %140, %168 : vector<16x256xf32>
    %c1_i32_68 = arith.constant 1 : i32
    %170 = vector.extract_strided_slice %169 {offsets = [0, 128], sizes = [16, 128], strides = [1, 1]} : vector<16x256xf32> to vector<16x128xf32>
    %cst_69 = arith.constant 0.000000e+00 : f32
    %171 = vector.broadcast %cst_69 : f32 to vector<16x128xf32>
    %172 = arith.maximumf %170, %171 : vector<16x128xf32>
    %c0_70 = arith.constant 0 : index
    %c0_71 = arith.constant 0 : index
    %173 = vector.load %arg6[%c0_70, %c0_71] : memref<16x16xbf16, #tpu.memory_space<vmem>>, vector<16x16xbf16>
    %174 = arith.truncf %172 : vector<16x128xf32> to vector<16x128xbf16>
    %cst_72 = arith.constant dense<0.000000e+00> : vector<16x128xf32>
    %175 = tpu.matmul %173, %174, %cst_72 {dimension_numbers = #tpu.dot_dimension_numbers<[1], [0], [0], [1], [0, 0, 1, 1], [], []>} : vector<16x16xbf16>, vector<16x128xbf16>, vector<16x128xf32> -> vector<16x128xf32>
    %c0_73 = arith.constant 0 : index
    %c0_74 = arith.constant 0 : index
    %176 = vector.load %arg7[%c0_73, %c0_74] : memref<16x1xf32, #tpu.memory_space<vmem>>, vector<16x1xf32>
    %177 = vector.broadcast %176 : vector<16x1xf32> to vector<16x128xf32>
    %178 = arith.addf %175, %177 : vector<16x128xf32>
    %cst_75 = arith.constant 0.000000e+00 : f32
    %179 = vector.broadcast %cst_75 : f32 to vector<16x128xf32>
    %180 = arith.maximumf %178, %179 : vector<16x128xf32>
    %c0_76 = arith.constant 0 : index
    %c0_77 = arith.constant 0 : index
    %181 = vector.load %arg8[%c0_76, %c0_77] : memref<16x16xbf16, #tpu.memory_space<vmem>>, vector<16x16xbf16>
    %182 = arith.truncf %180 : vector<16x128xf32> to vector<16x128xbf16>
    %cst_78 = arith.constant dense<0.000000e+00> : vector<16x128xf32>
    %183 = tpu.matmul %181, %182, %cst_78 {dimension_numbers = #tpu.dot_dimension_numbers<[1], [0], [0], [1], [0, 0, 1, 1], [], []>} : vector<16x16xbf16>, vector<16x128xbf16>, vector<16x128xf32> -> vector<16x128xf32>
    %c0_79 = arith.constant 0 : index
    %c0_80 = arith.constant 0 : index
    %184 = vector.load %arg9[%c0_79, %c0_80] : memref<16x1xf32, #tpu.memory_space<vmem>>, vector<16x1xf32>
    %185 = vector.broadcast %184 : vector<16x1xf32> to vector<16x128xf32>
    %186 = arith.addf %183, %185 : vector<16x128xf32>
    %c0_81 = arith.constant 0 : index
    %c0_82 = arith.constant 0 : index
    %c0_83 = arith.constant 0 : index
    %187 = vector.load %arg10[%c0_81, %c0_82, %c0_83] : memref<1x16x128xf32, #tpu.memory_space<vmem>>, vector<1x16x128xf32>
    %188 = vector.shape_cast %187 : vector<1x16x128xf32> to vector<16x128xf32>
    %189 = vector.shape_cast %186 : vector<16x128xf32> to vector<1x16x128xf32>
    tpu.vector_store %arg10[%c0_81, %c0_82, %c0_83], %189 {strides = array<i32>} : memref<1x16x128xf32, #tpu.memory_space<vmem>>, vector<1x16x128xf32>,
    return
  }
  func.func @transform_0(%arg0: i32, %arg1: i32) -> (i32, i32, i32) {
    %c0_i32 = arith.constant 0 : i32
    %c0_i32_0 = arith.constant 0 : i32
    %c0_i32_1 = arith.constant 0 : i32
    return %arg0, %c0_i32, %c0_i32_0 : i32, i32, i32
  }
  func.func @transform_1(%arg0: i32, %arg1: i32) -> (i32, i32) {
    %c0_i32 = arith.constant 0 : i32
    %c0_i32_0 = arith.constant 0 : i32
    %c0_i32_1 = arith.constant 0 : i32
    return %c0_i32, %c0_i32_0 : i32, i32
  }
  func.func @transform_2(%arg0: i32, %arg1: i32) -> (i32, i32, i32) {
    %c0_i32 = arith.constant 0 : i32
    %c0_i32_0 = arith.constant 0 : i32
    %c0_i32_1 = arith.constant 0 : i32
    %c0_i32_2 = arith.constant 0 : i32
    return %c0_i32, %c0_i32_0, %c0_i32_1 : i32, i32, i32
  }
  func.func @transform_3(%arg0: i32, %arg1: i32) -> (i32, i32, i32) {
    %c0_i32 = arith.constant 0 : i32
    %c0_i32_0 = arith.constant 0 : i32
    %c0_i32_1 = arith.constant 0 : i32
    %c0_i32_2 = arith.constant 0 : i32
    return %c0_i32, %c0_i32_0, %c0_i32_1 : i32, i32, i32
  }
  func.func @transform_4(%arg0: i32, %arg1: i32) -> (i32, i32) {
    %c0_i32 = arith.constant 0 : i32
    %c0_i32_0 = arith.constant 0 : i32
    %c0_i32_1 = arith.constant 0 : i32
    return %c0_i32, %c0_i32_0 : i32, i32
  }
  func.func @transform_5(%arg0: i32, %arg1: i32) -> (i32, i32) {
    %c0_i32 = arith.constant 0 : i32
    %c0_i32_0 = arith.constant 0 : i32
    %c0_i32_1 = arith.constant 0 : i32
    return %c0_i32, %c0_i32_0 : i32, i32
  }
  func.func @transform_6(%arg0: i32, %arg1: i32) -> (i32, i32) {
    %c0_i32 = arith.constant 0 : i32
    %c0_i32_0 = arith.constant 0 : i32
    %c0_i32_1 = arith.constant 0 : i32
    return %c0_i32, %c0_i32_0 : i32, i32
  }
  func.func @transform_7(%arg0: i32, %arg1: i32) -> (i32, i32) {
    %c0_i32 = arith.constant 0 : i32
    %c0_i32_0 = arith.constant 0 : i32
    %c0_i32_1 = arith.constant 0 : i32
    return %c0_i32, %c0_i32_0 : i32, i32
  }
  func.func @transform_8(%arg0: i32, %arg1: i32) -> (i32, i32, i32) {
    %c0_i32 = arith.constant 0 : i32
    %c0_i32_0 = arith.constant 0 : i32
    return %arg0, %c0_i32, %arg1 : i32, i32, i32
  }
}

</mosaic_0001>

<llo_original>
// kernel: tpu_custom_call.1
$region0: #{tpu_custom_call.1}
  #allocation0 [shape = 'u32[]', space=smem, size = 0x4, offset = 0x4, fixed_abs, tag = 'smem constant byte address 0x4 - core index']
  #allocation1 [shape = 'u32[144,128]{1,0:T(1,128)}', space=vmem, size = 0x12000, scoped, tag = 'internal scratch']
  %s0 = inlined_call_operand.vmem [shape: f32[2,1,256], index: 0, kind: input, shape index: {}]
  %s1 = inlined_call_operand.vmem [shape: f32[8,1], index: 1, kind: input, shape index: {}]
  %s2 = inlined_call_operand.vmem [shape: bf16[6,16,16], index: 2, kind: input, shape index: {}]
  %s3 = inlined_call_operand.vmem [shape: bf16[6,24,8], index: 3, kind: input, shape index: {}]
  %s4 = inlined_call_operand.vmem [shape: bf16[16,16], index: 4, kind: input, shape index: {}]
  %s5 = inlined_call_operand.vmem [shape: f32[16,1], index: 5, kind: input, shape index: {}]
  %s6 = inlined_call_operand.vmem [shape: bf16[16,16], index: 6, kind: input, shape index: {}]
  %s7 = inlined_call_operand.vmem [shape: f32[16,1], index: 7, kind: input, shape index: {}]
  %s8 = inlined_call_operand.hbm [shape: f32[2,16,128], index: 8, kind: output, shape index: {}]
  %s9 = sld [smem:[#allocation0]]
  $region65: #{tpu_custom_call.1} parent=0
    _
  %s11 = ssub.s32 1, %s9
  %s12 = scalar_select 0, %s11, %s9
  $region1: #{tpu_custom_call.1} parent=0
    #allocation2 [shape = 'u8[16384]{0}', space=vmem, size = 0x4000, scoped, tag = 'output window, operand 0']
    #allocation3 [shape = 's32[2]{0}', space=sflag, size = 0x8, scoped, tag = 'scoped memory for tpu_custom_call.1']
    %13 = vsyncpa [#allocation3], 0
    %s14 = scalar_lea.sflag [#allocation3], 1
    %15 = vsyncpa %s14, 0
    loop: start=0, step=1, limit=4
    $region2: #{tpu_custom_call.1} parent=1 // loop_pre_header
      _
    $region3: #{tpu_custom_call.1} parent=1 // loop_header
      %s17 = sphi 0, %s21
      %p18 = scmp.ge.s32.totalorder %s17, 4
      %s24 = sphi 0, %s36
      %s25 = sphi 0, %s32
      %s26 = sphi 0, %s24
      %s27 = sphi 0, %s25
      %s28 = sphi 0, %s26
      %s29 = sphi 0, %s27
      %s39 = sphi 0, %s41
      %s42 = sphi 0, %s39
      %s43 = sphi 0, %s42
      %s59 = sphi 0, %s43
      %s63 = sphi 0, %s63
      %s65 = sphi 0, %s63
      %s66 = sphi 0, %s65
      %s80 = sphi 0, %s66
      %s84 = sphi 0, %s84
      %s86 = sphi 0, %s84
      %s87 = sphi 0, %s86
      %s101 = sphi 0, %s87
      %s105 = sphi 0, %s105
      %s107 = sphi 0, %s105
      %s108 = sphi 0, %s107
      %s122 = sphi 0, %s108
      %s126 = sphi 0, %s126
      %s128 = sphi 0, %s126
      %s129 = sphi 0, %s128
      %s143 = sphi 0, %s129
      %s147 = sphi 0, %s147
      %s149 = sphi 0, %s147
      %s150 = sphi 0, %s149
      %s164 = sphi 0, %s150
      %s168 = sphi 0, %s168
      %s170 = sphi 0, %s168
      %s171 = sphi 0, %s170
      %s185 = sphi 0, %s171
      %s189 = sphi 0, %s189
      %s191 = sphi 0, %s189
      %s192 = sphi 0, %s191
      %s206 = sphi 0, %s192
      %s214 = sphi 0, %s216
      %s217 = sphi 0, %s214
      %s218 = sphi 0, %s217
      %s234 = sphi 0, %s218
    $region4: #{tpu_custom_call.1} parent=1 // loop_header_branch
      %20 = sbr.rel (%p18) target = $region8
    $region5: #{tpu_custom_call.1} parent=1 // loop_body
      %s22 = ssub.s32 %s17, 1
      %s23 = ssub.s32 %s17, 2
      %s30 = sadd.s32 1, %s25
      %p31 = scmp.ge.s32.totalorder %s30, 1
      %s32 = scalar_select %p31, 0, %s30
      %s33 = sadd.s32 1, %s24
      %s34 = scalar_select %p31, %s33, %s24
      %p35 = scmp.ge.s32.totalorder %s34, 2
      %s36 = scalar_select %p35, 0, %s34
      %s37 = ssub.s32 %s24, %s36
      %p38 = scmp.eq.s32.totalorder %s37, 0
      %s40 = sadd.s32 %s39, 1
      %s41 = scalar_select %p38, %s39, %s40
      %p44 = pneg %p38
      %p45 = scmp.eq.s32.totalorder %s17, 1
      %p46 = por %p44, %p45
      %p47 = scmp.ne.s32.totalorder %s39, %s42
      %p48 = scmp.eq.s32.totalorder %s17, 0
      %p49 = por %p47, %p48
      %p50 = scmp.ne.s32.totalorder %s39, %s42
      %p51 = scmp.eq.s32.totalorder %s22, 1
      %p52 = por %p50, %p51
      %p53 = scmp.ne.s32.totalorder %s42, %s43
      %p54 = scmp.eq.s32.totalorder %s22, 0
      %p55 = por %p53, %p54
      %p56 = scmp.ne.s32.totalorder %s42, %s43
      %p57 = scmp.eq.s32.totalorder %s23, 1
      %p58 = por %p56, %p57
      %p60 = scmp.ne.s32.totalorder %s43, %s59
      %p61 = scmp.eq.s32.totalorder %s23, 0
      %p62 = por %p60, %p61
      %s64 = sadd.s32 %s63, 1
      %p67 = scmp.eq.s32.totalorder %s17, 1
      %p68 = scmp.ne.s32.totalorder %s63, %s65
      %p69 = scmp.eq.s32.totalorder %s17, 0
      %p70 = por %p68, %p69
      %p71 = scmp.ne.s32.totalorder %s63, %s65
      %p72 = scmp.eq.s32.totalorder %s22, 1
      %p73 = por %p71, %p72
      %p74 = scmp.ne.s32.totalorder %s65, %s66
      %p75 = scmp.eq.s32.totalorder %s22, 0
      %p76 = por %p74, %p75
      %p77 = scmp.ne.s32.totalorder %s65, %s66
      %p78 = scmp.eq.s32.totalorder %s23, 1
      %p79 = por %p77, %p78
      %p81 = scmp.ne.s32.totalorder %s66, %s80
      %p82 = scmp.eq.s32.totalorder %s23, 0
      %p83 = por %p81, %p82
      %s85 = sadd.s32 %s84, 1
      %p88 = scmp.eq.s32.totalorder %s17, 1
      %p89 = scmp.ne.s32.totalorder %s84, %s86
      %p90 = scmp.eq.s32.totalorder %s17, 0
      %p91 = por %p89, %p90
      %p92 = scmp.ne.s32.totalorder %s84, %s86
      %p93 = scmp.eq.s32.totalorder %s22, 1
      %p94 = por %p92, %p93
      %p95 = scmp.ne.s32.totalorder %s86, %s87
      %p96 = scmp.eq.s32.totalorder %s22, 0
      %p97 = por %p95, %p96
      %p98 = scmp.ne.s32.totalorder %s86, %s87
      %p99 = scmp.eq.s32.totalorder %s23, 1
      %p100 = por %p98, %p99
      %p102 = scmp.ne.s32.totalorder %s87, %s101
      %p103 = scmp.eq.s32.totalorder %s23, 0
      %p104 = por %p102, %p103
      %s106 = sadd.s32 %s105, 1
      %p109 = scmp.eq.s32.totalorder %s17, 1
      %p110 = scmp.ne.s32.totalorder %s105, %s107
      %p111 = scmp.eq.s32.totalorder %s17, 0
      %p112 = por %p110, %p111
      %p113 = scmp.ne.s32.totalorder %s105, %s107
      %p114 = scmp.eq.s32.totalorder %s22, 1
      %p115 = por %p113, %p114
      %p116 = scmp.ne.s32.totalorder %s107, %s108
      %p117 = scmp.eq.s32.totalorder %s22, 0
      %p118 = por %p116, %p117
      %p119 = scmp.ne.s32.totalorder %s107, %s108
      %p120 = scmp.eq.s32.totalorder %s23, 1
      %p121 = por %p119, %p120
      %p123 = scmp.ne.s32.totalorder %s108, %s122
      %p124 = scmp.eq.s32.totalorder %s23, 0
      %p125 = por %p123, %p124
      %s127 = sadd.s32 %s126, 1
      %p130 = scmp.eq.s32.totalorder %s17, 1
      %p131 = scmp.ne.s32.totalorder %s126, %s128
      %p132 = scmp.eq.s32.totalorder %s17, 0
      %p133 = por %p131, %p132
      %p134 = scmp.ne.s32.totalorder %s126, %s128
      %p135 = scmp.eq.s32.totalorder %s22, 1
      %p136 = por %p134, %p135
      %p137 = scmp.ne.s32.totalorder %s128, %s129
      %p138 = scmp.eq.s32.totalorder %s22, 0
      %p139 = por %p137, %p138
      %p140 = scmp.ne.s32.totalorder %s128, %s129
      %p141 = scmp.eq.s32.totalorder %s23, 1
      %p142 = por %p140, %p141
      %p144 = scmp.ne.s32.totalorder %s129, %s143
      %p145 = scmp.eq.s32.totalorder %s23, 0
      %p146 = por %p144, %p145
      %s148 = sadd.s32 %s147, 1
      %p151 = scmp.eq.s32.totalorder %s17, 1
      %p152 = scmp.ne.s32.totalorder %s147, %s149
      %p153 = scmp.eq.s32.totalorder %s17, 0
      %p154 = por %p152, %p153
      %p155 = scmp.ne.s32.totalorder %s147, %s149
      %p156 = scmp.eq.s32.totalorder %s22, 1
      %p157 = por %p155, %p156
      %p158 = scmp.ne.s32.totalorder %s149, %s150
      %p159 = scmp.eq.s32.totalorder %s22, 0
      %p160 = por %p158, %p159
      %p161 = scmp.ne.s32.totalorder %s149, %s150
      %p162 = scmp.eq.s32.totalorder %s23, 1
      %p163 = por %p161, %p162
      %p165 = scmp.ne.s32.totalorder %s150, %s164
      %p166 = scmp.eq.s32.totalorder %s23, 0
      %p167 = por %p165, %p166
      %s169 = sadd.s32 %s168, 1
      %p172 = scmp.eq.s32.totalorder %s17, 1
      %p173 = scmp.ne.s32.totalorder %s168, %s170
      %p174 = scmp.eq.s32.totalorder %s17, 0
      %p175 = por %p173, %p174
      %p176 = scmp.ne.s32.totalorder %s168, %s170
      %p177 = scmp.eq.s32.totalorder %s22, 1
      %p178 = por %p176, %p177
      %p179 = scmp.ne.s32.totalorder %s170, %s171
      %p180 = scmp.eq.s32.totalorder %s22, 0
      %p181 = por %p179, %p180
      %p182 = scmp.ne.s32.totalorder %s170, %s171
      %p183 = scmp.eq.s32.totalorder %s23, 1
      %p184 = por %p182, %p183
      %p186 = scmp.ne.s32.totalorder %s171, %s185
      %p187 = scmp.eq.s32.totalorder %s23, 0
      %p188 = por %p186, %p187
      %s190 = sadd.s32 %s189, 1
      %p193 = scmp.eq.s32.totalorder %s17, 1
      %p194 = scmp.ne.s32.totalorder %s189, %s191
      %p195 = scmp.eq.s32.totalorder %s17, 0
      %p196 = por %p194, %p195
      %p197 = scmp.ne.s32.totalorder %s189, %s191
      %p198 = scmp.eq.s32.totalorder %s22, 1
      %p199 = por %p197, %p198
      %p200 = scmp.ne.s32.totalorder %s191, %s192
      %p201 = scmp.eq.s32.totalorder %s22, 0
      %p202 = por %p200, %p201
      %p203 = scmp.ne.s32.totalorder %s191, %s192
      %p204 = scmp.eq.s32.totalorder %s23, 1
      %p205 = por %p203, %p204
      %p207 = scmp.ne.s32.totalorder %s192, %s206
      %p208 = scmp.eq.s32.totalorder %s23, 0
      %p209 = por %p207, %p208
      %s210 = ssub.s32 %s24, %s36
      %s211 = ssub.s32 %s25, %s32
      %s212 = sor.u32 %s210, %s211
      %p213 = scmp.eq.s32.totalorder %s212, 0
      %s215 = sadd.s32 %s214, 1
      %s216 = scalar_select %p213, %s214, %s215
      %p219 = pneg %p213
      %p220 = scmp.eq.s32.totalorder %s17, 1
      %p221 = por %p219, %p220
      %p222 = scmp.ne.s32.totalorder %s214, %s217
      %p223 = scmp.eq.s32.totalorder %s17, 0
      %p224 = por %p222, %p223
      %p225 = scmp.ne.s32.totalorder %s214, %s217
      %p226 = scmp.eq.s32.totalorder %s22, 1
      %p227 = por %p225, %p226
      %p228 = scmp.ne.s32.totalorder %s217, %s218
      %p229 = scmp.eq.s32.totalorder %s22, 0
      %p230 = por %p228, %p229
      %p231 = scmp.ne.s32.totalorder %s217, %s218
      %p232 = scmp.eq.s32.totalorder %s23, 1
      %p233 = por %p231, %p232
      %p235 = scmp.ne.s32.totalorder %s218, %s234
      %p236 = scmp.eq.s32.totalorder %s23, 0
      %p237 = por %p235, %p236
      %p238 = scmp.le.s32.totalorder 1, %s17
      %p239 = scmp.lt.s32.totalorder %s17, 3
      %p240 = pnand %p238, %p239
      %p241 = pneg %p240
      // Predicated region
      $region9: #{tpu_custom_call.1} parent=5 // pred_check
        _
      $region10: #{tpu_custom_call.1} parent=5 // pred_check_branch
        %243 = sbr.rel (%p240) target = $region12
      $region11: #{tpu_custom_call.1} parent=5 // pred_region
        %s244 = ssub.s32 %s17, 1
        // Predicated region
        $region13: #{tpu_custom_call.1} parent=11 // pred_check
          %p245 = pneg %p76
        $region14: #{tpu_custom_call.1} parent=11 // pred_check_branch
          %247 = sbr.rel (%p245) target = $region16
        $region15: #{tpu_custom_call.1} parent=11 // pred_region
          _
        $region16: #{tpu_custom_call.1} parent=11 // pred_fallthru
          _
        // Predicated region
        $region17: #{tpu_custom_call.1} parent=11 // pred_check
          %p248 = pneg %p97
        $region18: #{tpu_custom_call.1} parent=11 // pred_check_branch
          %250 = sbr.rel (%p248) target = $region20
        $region19: #{tpu_custom_call.1} parent=11 // pred_region
          _
        $region20: #{tpu_custom_call.1} parent=11 // pred_fallthru
          _
        // Predicated region
        $region21: #{tpu_custom_call.1} parent=11 // pred_check
          %p251 = pneg %p118
        $region22: #{tpu_custom_call.1} parent=11 // pred_check_branch
          %253 = sbr.rel (%p251) target = $region24
        $region23: #{tpu_custom_call.1} parent=11 // pred_region
          _
        $region24: #{tpu_custom_call.1} parent=11 // pred_fallthru
          _
        // Predicated region
        $region25: #{tpu_custom_call.1} parent=11 // pred_check
          %p254 = pneg %p139
        $region26: #{tpu_custom_call.1} parent=11 // pred_check_branch
          %256 = sbr.rel (%p254) target = $region28
        $region27: #{tpu_custom_call.1} parent=11 // pred_region
          _
        $region28: #{tpu_custom_call.1} parent=11 // pred_fallthru
          _
        // Predicated region
        $region29: #{tpu_custom_call.1} parent=11 // pred_check
          %p257 = pneg %p160
        $region30: #{tpu_custom_call.1} parent=11 // pred_check_branch
          %259 = sbr.rel (%p257) target = $region32
        $region31: #{tpu_custom_call.1} parent=11 // pred_region
          _
        $region32: #{tpu_custom_call.1} parent=11 // pred_fallthru
          _
        // Predicated region
        $region33: #{tpu_custom_call.1} parent=11 // pred_check
          %p260 = pneg %p181
        $region34: #{tpu_custom_call.1} parent=11 // pred_check_branch
          %262 = sbr.rel (%p260) target = $region36
        $region35: #{tpu_custom_call.1} parent=11 // pred_region
          _
        $region36: #{tpu_custom_call.1} parent=11 // pred_fallthru
          _
        // Predicated region
        $region37: #{tpu_custom_call.1} parent=11 // pred_check
          %p263 = pneg %p202
        $region38: #{tpu_custom_call.1} parent=11 // pred_check_branch
          %265 = sbr.rel (%p263) target = $region40
        $region39: #{tpu_custom_call.1} parent=11 // pred_region
          _
        $region40: #{tpu_custom_call.1} parent=11 // pred_fallthru
          _
      $region12: #{tpu_custom_call.1} parent=5 // pred_fallthru
        _
      %p266 = scmp.lt.s32.totalorder %s17, 2
      // Predicated region
      $region41: #{tpu_custom_call.1} parent=5 // pred_check
        %p267 = pneg %p266
      $region42: #{tpu_custom_call.1} parent=5 // pred_check_branch
        %269 = sbr.rel (%p267) target = $region44
      $region43: #{tpu_custom_call.1} parent=5 // pred_region
        // Predicated region
        $region45: #{tpu_custom_call.1} parent=43 // pred_check
          %p270 = pneg %p49
        $region46: #{tpu_custom_call.1} parent=43 // pred_check_branch
          %272 = sbr.rel (%p270) target = $region48
        $region47: #{tpu_custom_call.1} parent=43 // pred_region
          %p273 = scmp.lt.s32.totalorder %s24, 1
          %s274 = scalar_select %p273, %s24, 1
          %s275 = smul.addr %s274, 2
          %s276 = scalar_lea.vmem %s0, %s275
        $region48: #{tpu_custom_call.1} parent=43 // pred_fallthru
          _
      $region44: #{tpu_custom_call.1} parent=5 // pred_fallthru
        _
      %p277 = scmp.le.s32.totalorder 1, %s17
      %p278 = scmp.lt.s32.totalorder %s17, 3
      %p279 = pnand %p277, %p278
      %p280 = pneg %p279
      // Predicated region
      $region49: #{tpu_custom_call.1} parent=5 // pred_check
        _
      $region50: #{tpu_custom_call.1} parent=5 // pred_check_branch
        %282 = sbr.rel (%p279) target = $region52
      $region51: #{tpu_custom_call.1} parent=5 // pred_region
        %s283 = ssub.s32 %s17, 1
        %p284 = scmp.lt.s32.totalorder %s26, 1
        %s285 = scalar_select %p284, %s26, 1
        %s286 = smul.addr %s285, 2
        %s287 = scalar_lea.vmem %s0, %s286
        %p288 = pneg %p55
        %p289 = pneg %p52
        %p290 = pneg %p76
        %p291 = pneg %p73
        %p292 = pneg %p97
        %p293 = pneg %p94
        %p294 = pneg %p118
        %p295 = pneg %p115
        %p296 = pneg %p139
        %p297 = pneg %p136
        %p298 = pneg %p160
        %p299 = pneg %p157
        %p300 = pneg %p181
        %p301 = pneg %p178
        %p302 = pneg %p202
        %p303 = pneg %p199
        %p304 = pneg %p230
        %p305 = pneg %p227
        %s306 = sand.u32 %s217, 1
        %s307 = scalar_lea.sflag [#allocation3], %s306
        %s308 = sand.u32 %s217, 1
        %s309 = smul.addr %s308, 16
        %s310 = scalar_lea.vmem [#allocation2], %s309
        %p311 = scmp.lt.s32.totalorder %s26, 1
        %s312 = scalar_select %p311, %s26, 1
        %s313 = smul.addr %s312, 2
        %s314 = scalar_lea.vmem %s0, %s313
        %s316 = smul.u32 %s27, 128
        %s317 = sshra.s32 %s316, 7
        %s318 = sand.u32 %s316, 127
        %s319 = scalar_lea.vmem %s314, %s317
        %v320 = vld [vmem:[%s319] sm:$0x3]
        %v321 = vld [vmem:[%s1] sm:$0xff]
        %323 = vset.pattern.permute.xlu0 0
        %324 = vperm.xlu0 %323, %v321
        %v325 = vpop.permute.xlu0 %324
        %v328 = vlaneseq
        %v329 = vshrl.u32 %v328, 7
        %v330 = vsub.s32 0, %v329
        %v331 = vrot.slane %v320, %v330
        %v332 = vlaneseq
        %v333 = vshrl.u32 %v332, 7
        %v334 = vsub.s32 1, %v333
        %v335 = vrot.slane %v320, %v334
        %v338 = vmul.f32 %v325, %v331
        %v339 = vmul.f32 %v325, %v335
        %v340 = vld [vmem:[%s2] sm:$0xf]
        %v341 = vld [vmem:[%s2 + $0x4] sm:$0xf]
        %v342 = vld [vmem:[%s3] sm:$0xf]
        %v343 = vld [vmem:[%s3 + $0x4] sm:$0xf]
        %v344 = vld [vmem:[%s3 + $0x8] sm:$0xf]
        %345 = vrot.lane.b32.xlu0 %v338, 1
        %v346 = vpop.permute.xlu0 %345
        %347 = vrot.lane.b32.xlu0 %v339, 1
        %v348 = vpop.permute.xlu0 %347
        %v349 = vlaneseq
        %v350 = vand.u32 %v349, 127
        %vm351 = vcmp.lt.s32.totalorder %v350, 1
        %v352 = vsel %vm351, %v346, %v348
        %v353 = vsel %vm351, %v348, %v346
        %v354 = vpack.c.bf16 %v338, %v353
        %v355 = vpack.c.bf16 %v339, %v352
        %v358 = vunpack.c.l.b16 %v340
        %v359 = vunpack.c.l.b16 %v341
        %v360 = vpack.c.b16 %v359, %v358
        %vm361 = vcmask 130048
        %v363 = vsel %vm361, %v360, 0
        %365 = vmatprep.subr.bf16.mxu0 %v355
        %366 = vmatpush1.bf16.msra.mxu0 %v354
        %367 = vmatprep.subr.bf16.mxu0 0
        %368 = vmatpush1.bf16.msra.mxu0 0
        %369 = vmatprep.subr.bf16.mxu0 0
        %370 = vmatpush1.bf16.msra.mxu0 0
        %371 = vmatprep.subr.bf16.mxu0 0
        %372 = vmatpush1.bf16.msra.mxu0 0
        %373 = vmatprep.subr.bf16.mxu0 0
        %374 = vmatpush1.bf16.msra.mxu0 0
        %375 = vmatprep.subr.bf16.mxu0 0
        %376 = vmatpush1.bf16.msra.mxu0 0
        %377 = vmatprep.subr.bf16.mxu0 0
        %378 = vmatpush1.bf16.msra.mxu0 0
        %379 = vmatprep.subr.bf16.mxu0 0
        %380 = vmatpush1.bf16.msra.mxu0 0
        %381 = vmatprep.subr.bf16.mxu0 0
        %382 = vmatpush1.bf16.msra.mxu0 0
        %383 = vmatprep.subr.bf16.mxu0 0
        %384 = vmatpush1.bf16.msra.mxu0 0
        %385 = vmatprep.subr.bf16.mxu0 0
        %386 = vmatpush1.bf16.msra.mxu0 0
        %387 = vmatprep.subr.bf16.mxu0 0
        %388 = vmatpush1.bf16.msra.mxu0 0
        %389 = vmatprep.subr.bf16.mxu0 0
        %390 = vmatpush1.bf16.msra.mxu0 0
        %391 = vmatprep.subr.bf16.mxu0 0
        %392 = vmatpush1.bf16.msra.mxu0 0
        %393 = vmatprep.subr.bf16.mxu0 0
        %394 = vmatpush1.bf16.msra.mxu0 0
        %395 = vmatprep.subr.bf16.mxu0 0
        %396 = vmatpush1.bf16.msra.mxu0 0
        %397 = vmatprep.mubr.bf16.mxu0 0
        %398 = vmatmul.mubr.bf16.gmra.mrb[0].mxu0 %v363
        %v399 = vpop.f32.mrb[0].mxu0
        %v400 = vadd.f32 0.0, %v399
        %v401 = vpop.f32.mrb[0].mxu0
        %v402 = vadd.f32 0.0, %v401
        %v403 = vpop.f32.mrb[0].mxu0
        %v404 = vadd.f32 0.0, %v403
        %v405 = vpop.f32.mrb[0].mxu0
        %v406 = vadd.f32 0.0, %v405
        %407 = vdwg.mxu0
        %v408 = vtanh.pop %v400
        %v409 = vtanh.pop %v402
        %v410 = vmul.f32 %v404, 0.5
        %v411 = vmul.f32 %v406, 0.5
        %v412 = vtanh.pop %v410
        %v413 = vtanh.pop %v411
        %v414 = vadd.f32 %v412, 1.0
        %v415 = vadd.f32 %v413, 1.0
        %v416 = vmul.f32 %v414, 0.5
        %v417 = vmul.f32 %v415, 0.5
        %v418 = vmul.f32 %v408, %v416
        %v419 = vmul.f32 %v409, %v417
        %v420 = vpack.c.bf16 %v418, %v418
        %v421 = vpack.c.bf16 %v419, %v419
        %v425 = vunpack.c.l.b16 %v342
        %v426 = vunpack.c.l.b16 %v343
        %v427 = vunpack.c.l.b16 %v344
        %v428 = vpack.c.b16 %v426, %v425
        %v429 = vpack.c.b16 %v427, %v427
        %vm430 = vcmask 64512
        %v432 = vsel %vm430, %v428, 0
        %v435 = vsel %vm430, %v429, 0
        %vm437 = vcmask 1043456
        %v439 = vsel %vm437, %v420, 0
        %v442 = vsel %vm437, %v421, 0
        %444 = vmatprep.subr.bf16.mxu0 %v442
        %445 = vmatpush1.bf16.msra.mxu0 %v439
        %446 = vmatprep.subr.bf16.mxu0 0
        %447 = vmatpush1.bf16.msra.mxu0 0
        %448 = vmatprep.subr.bf16.mxu0 0
        %449 = vmatpush1.bf16.msra.mxu0 0
        %450 = vmatprep.subr.bf16.mxu0 0
        %451 = vmatpush1.bf16.msra.mxu0 0
        %452 = vmatprep.subr.bf16.mxu0 0
        %453 = vmatpush1.bf16.msra.mxu0 0
        %454 = vmatprep.subr.bf16.mxu0 0
        %455 = vmatpush1.bf16.msra.mxu0 0
        %456 = vmatprep.subr.bf16.mxu0 0
        %457 = vmatpush1.bf16.msra.mxu0 0
        %458 = vmatprep.subr.bf16.mxu0 0
        %459 = vmatpush1.bf16.msra.mxu0 0
        %460 = vmatprep.subr.bf16.mxu0 0
        %461 = vmatpush1.bf16.msra.mxu0 0
        %462 = vmatprep.subr.bf16.mxu0 0
        %463 = vmatpush1.bf16.msra.mxu0 0
        %464 = vmatprep.subr.bf16.mxu0 0
        %465 = vmatpush1.bf16.msra.mxu0 0
        %466 = vmatprep.subr.bf16.mxu0 0
        %467 = vmatpush1.bf16.msra.mxu0 0
        %468 = vmatprep.subr.bf16.mxu0 0
        %469 = vmatpush1.bf16.msra.mxu0 0
        %470 = vmatprep.subr.bf16.mxu0 0
        %471 = vmatpush1.bf16.msra.mxu0 0
        %472 = vmatprep.subr.bf16.mxu0 0
        %473 = vmatpush1.bf16.msra.mxu0 0
        %474 = vmatprep.subr.bf16.mxu0 0
        %475 = vmatpush1.bf16.msra.mxu0 0
        %476 = vmatprep.mubr.bf16.mxu0 0
        %477 = vmatmul.mubr.bf16.gmra.mrb[0].mxu0 %v432
        %v478 = vpop.f32.mrb[0].mxu0
        %v479 = vadd.f32 0.0, %v478
        %v480 = vpop.f32.mrb[0].mxu0
        %v481 = vadd.f32 0.0, %v480
        %v482 = vpop.f32.mrb[0].mxu0
        %v483 = vpop.f32.mrb[0].mxu0
        %v484 = vadd.f32 0.0, %v483
        %485 = vmatprep.mubr.bf16.mxu0 0
        %486 = vmatmul.mubr.bf16.gmra.mrb[0].mxu0 %v435
        %v487 = vpop.f32.mrb[0].mxu0
        %v488 = vpop.f32.mrb[0].mxu0
        %v489 = vadd.f32 0.0, %v488
        %v490 = vpop.f32.mrb[0].mxu0
        %v491 = vpop.f32.mrb[0].mxu0
        %492 = vdwg.mxu0
        %v493 = vadd.f32 %v338, %v479
        %v494 = vadd.f32 %v339, %v481
        %s495 = scalar_lea.vmem %s2, 8
        %v496 = vld [vmem:[%s495] sm:$0xf]
        %v497 = vld [vmem:[%s495 + $0x4] sm:$0xf]
        %s498 = scalar_lea.vmem %s3, 12
        %v499 = vld [vmem:[%s498] sm:$0xf]
        %v500 = vld [vmem:[%s498 + $0x4] sm:$0xf]
        %v501 = vld [vmem:[%s498 + $0x8] sm:$0xf]
        %502 = vrot.lane.b32.xlu0 %v493, 2
        %v503 = vpop.permute.xlu0 %502
        %504 = vrot.lane.b32.xlu0 %v494, 2
        %v505 = vpop.permute.xlu0 %504
        %vm506 = vcmp.lt.s32.totalorder %v350, 2
        %v507 = vsel %vm506, %v503, %v505
        %v508 = vsel %vm506, %v505, %v503
        %v509 = vpack.c.bf16 %v493, %v508
        %v510 = vpack.c.bf16 %v494, %v507
        %v513 = vunpack.c.l.b16 %v496
        %v514 = vunpack.c.l.b16 %v497
        %v515 = vpack.c.b16 %v514, %v513
        %v517 = vsel %vm361, %v515, 0
        %519 = vmatprep.subr.bf16.mxu0 %v510
        %520 = vmatpush1.bf16.msra.mxu0 %v509
        %521 = vmatprep.subr.bf16.mxu0 0
        %522 = vmatpush1.bf16.msra.mxu0 0
        %523 = vmatprep.subr.bf16.mxu0 0
        %524 = vmatpush1.bf16.msra.mxu0 0
        %525 = vmatprep.subr.bf16.mxu0 0
        %526 = vmatpush1.bf16.msra.mxu0 0
        %527 = vmatprep.subr.bf16.mxu0 0
        %528 = vmatpush1.bf16.msra.mxu0 0
        %529 = vmatprep.subr.bf16.mxu0 0
        %530 = vmatpush1.bf16.msra.mxu0 0
        %531 = vmatprep.subr.bf16.mxu0 0
        %532 = vmatpush1.bf16.msra.mxu0 0
        %533 = vmatprep.subr.bf16.mxu0 0
        %534 = vmatpush1.bf16.msra.mxu0 0
        %535 = vmatprep.subr.bf16.mxu0 0
        %536 = vmatpush1.bf16.msra.mxu0 0
        %537 = vmatprep.subr.bf16.mxu0 0
        %538 = vmatpush1.bf16.msra.mxu0 0
        %539 = vmatprep.subr.bf16.mxu0 0
        %540 = vmatpush1.bf16.msra.mxu0 0
        %541 = vmatprep.subr.bf16.mxu0 0
        %542 = vmatpush1.bf16.msra.mxu0 0
        %543 = vmatprep.subr.bf16.mxu0 0
        %544 = vmatpush1.bf16.msra.mxu0 0
        %545 = vmatprep.subr.bf16.mxu0 0
        %546 = vmatpush1.bf16.msra.mxu0 0
        %547 = vmatprep.subr.bf16.mxu0 0
        %548 = vmatpush1.bf16.msra.mxu0 0
        %549 = vmatprep.subr.bf16.mxu0 0
        %550 = vmatpush1.bf16.msra.mxu0 0
        %551 = vmatprep.mubr.bf16.mxu0 0
        %552 = vmatmul.mubr.bf16.gmra.mrb[0].mxu0 %v517
        %v553 = vpop.f32.mrb[0].mxu0
        %v554 = vadd.f32 0.0, %v553
        %v555 = vpop.f32.mrb[0].mxu0
        %v556 = vadd.f32 0.0, %v555
        %v557 = vpop.f32.mrb[0].mxu0
        %v558 = vadd.f32 0.0, %v557
        %v559 = vpop.f32.mrb[0].mxu0
        %v560 = vadd.f32 0.0, %v559
        %561 = vdwg.mxu0
        %v562 = vtanh.pop %v554
        %v563 = vtanh.pop %v556
        %v564 = vmul.f32 %v558, 0.5
        %v565 = vmul.f32 %v560, 0.5
        %v566 = vtanh.pop %v564
        %v567 = vtanh.pop %v565
        %v568 = vadd.f32 %v566, 1.0
        %v569 = vadd.f32 %v567, 1.0
        %v570 = vmul.f32 %v568, 0.5
        %v571 = vmul.f32 %v569, 0.5
        %v572 = vmul.f32 %v562, %v570
        %v573 = vmul.f32 %v563, %v571
        %v574 = vpack.c.bf16 %v572, %v572
        %v575 = vpack.c.bf16 %v573, %v573
        %v579 = vunpack.c.l.b16 %v499
        %v580 = vunpack.c.l.b16 %v500
        %v581 = vunpack.c.l.b16 %v501
        %v582 = vpack.c.b16 %v580, %v579
        %v583 = vpack.c.b16 %v581, %v581
        %v585 = vsel %vm430, %v582, 0
        %v588 = vsel %vm430, %v583, 0
        %v591 = vsel %vm437, %v574, 0
        %v594 = vsel %vm437, %v575, 0
        %596 = vmatprep.subr.bf16.mxu0 %v594
        %597 = vmatpush1.bf16.msra.mxu0 %v591
        %598 = vmatprep.subr.bf16.mxu0 0
        %599 = vmatpush1.bf16.msra.mxu0 0
        %600 = vmatprep.subr.bf16.mxu0 0
        %601 = vmatpush1.bf16.msra.mxu0 0
        %602 = vmatprep.subr.bf16.mxu0 0
        %603 = vmatpush1.bf16.msra.mxu0 0
        %604 = vmatprep.subr.bf16.mxu0 0
        %605 = vmatpush1.bf16.msra.mxu0 0
        %606 = vmatprep.subr.bf16.mxu0 0
        %607 = vmatpush1.bf16.msra.mxu0 0
        %608 = vmatprep.subr.bf16.mxu0 0
        %609 = vmatpush1.bf16.msra.mxu0 0
        %610 = vmatprep.subr.bf16.mxu0 0
        %611 = vmatpush1.bf16.msra.mxu0 0
        %612 = vmatprep.subr.bf16.mxu0 0
        %613 = vmatpush1.bf16.msra.mxu0 0
        %614 = vmatprep.subr.bf16.mxu0 0
        %615 = vmatpush1.bf16.msra.mxu0 0
        %616 = vmatprep.subr.bf16.mxu0 0
        %617 = vmatpush1.bf16.msra.mxu0 0
        %618 = vmatprep.subr.bf16.mxu0 0
        %619 = vmatpush1.bf16.msra.mxu0 0
        %620 = vmatprep.subr.bf16.mxu0 0
        %621 = vmatpush1.bf16.msra.mxu0 0
        %622 = vmatprep.subr.bf16.mxu0 0
        %623 = vmatpush1.bf16.msra.mxu0 0
        %624 = vmatprep.subr.bf16.mxu0 0
        %625 = vmatpush1.bf16.msra.mxu0 0
        %626 = vmatprep.subr.bf16.mxu0 0
        %627 = vmatpush1.bf16.msra.mxu0 0
        %628 = vmatprep.mubr.bf16.mxu0 0
        %629 = vmatmul.mubr.bf16.gmra.mrb[0].mxu0 %v585
        %v630 = vpop.f32.mrb[0].mxu0
        %v631 = vadd.f32 0.0, %v630
        %v632 = vpop.f32.mrb[0].mxu0
        %v633 = vadd.f32 0.0, %v632
        %v634 = vpop.f32.mrb[0].mxu0
        %v635 = vpop.f32.mrb[0].mxu0
        %v636 = vadd.f32 0.0, %v635
        %637 = vmatprep.mubr.bf16.mxu0 0
        %638 = vmatmul.mubr.bf16.gmra.mrb[0].mxu0 %v588
        %v639 = vpop.f32.mrb[0].mxu0
        %v640 = vpop.f32.mrb[0].mxu0
        %v641 = vadd.f32 0.0, %v640
        %v642 = vpop.f32.mrb[0].mxu0
        %v643 = vpop.f32.mrb[0].mxu0
        %644 = vdwg.mxu0
        %v645 = vadd.f32 %v493, %v631
        %v646 = vadd.f32 %v494, %v633
        %v647 = vadd.f32 %v484, %v636
        %v648 = vadd.f32 %v489, %v641
        %s649 = scalar_lea.vmem %s2, 16
        %v650 = vld [vmem:[%s649] sm:$0xf]
        %v651 = vld [vmem:[%s649 + $0x4] sm:$0xf]
        %s652 = scalar_lea.vmem %s3, 24
        %v653 = vld [vmem:[%s652] sm:$0xf]
        %v654 = vld [vmem:[%s652 + $0x4] sm:$0xf]
        %v655 = vld [vmem:[%s652 + $0x8] sm:$0xf]
        %656 = vrot.lane.b32.xlu0 %v645, 4
        %v657 = vpop.permute.xlu0 %656
        %658 = vrot.lane.b32.xlu0 %v646, 4
        %v659 = vpop.permute.xlu0 %658
        %vm660 = vcmp.lt.s32.totalorder %v350, 4
        %v661 = vsel %vm660, %v657, %v659
        %v662 = vsel %vm660, %v659, %v657
        %v663 = vpack.c.bf16 %v645, %v662
        %v664 = vpack.c.bf16 %v646, %v661
        %v667 = vunpack.c.l.b16 %v650
        %v668 = vunpack.c.l.b16 %v651
        %v669 = vpack.c.b16 %v668, %v667
        %v671 = vsel %vm361, %v669, 0
        %673 = vmatprep.subr.bf16.mxu0 %v664
        %674 = vmatpush1.bf16.msra.mxu0 %v663
        %675 = vmatprep.subr.bf16.mxu0 0
        %676 = vmatpush1.bf16.msra.mxu0 0
        %677 = vmatprep.subr.bf16.mxu0 0
        %678 = vmatpush1.bf16.msra.mxu0 0
        %679 = vmatprep.subr.bf16.mxu0 0
        %680 = vmatpush1.bf16.msra.mxu0 0
        %681 = vmatprep.subr.bf16.mxu0 0
        %682 = vmatpush1.bf16.msra.mxu0 0
        %683 = vmatprep.subr.bf16.mxu0 0
        %684 = vmatpush1.bf16.msra.mxu0 0
        %685 = vmatprep.subr.bf16.mxu0 0
        %686 = vmatpush1.bf16.msra.mxu0 0
        %687 = vmatprep.subr.bf16.mxu0 0
        %688 = vmatpush1.bf16.msra.mxu0 0
        %689 = vmatprep.subr.bf16.mxu0 0
        %690 = vmatpush1.bf16.msra.mxu0 0
        %691 = vmatprep.subr.bf16.mxu0 0
        %692 = vmatpush1.bf16.msra.mxu0 0
        %693 = vmatprep.subr.bf16.mxu0 0
        %694 = vmatpush1.bf16.msra.mxu0 0
        %695 = vmatprep.subr.bf16.mxu0 0
        %696 = vmatpush1.bf16.msra.mxu0 0
        %697 = vmatprep.subr.bf16.mxu0 0
        %698 = vmatpush1.bf16.msra.mxu0 0
        %699 = vmatprep.subr.bf16.mxu0 0
        %700 = vmatpush1.bf16.msra.mxu0 0
        %701 = vmatprep.subr.bf16.mxu0 0
        %702 = vmatpush1.bf16.msra.mxu0 0
        %703 = vmatprep.subr.bf16.mxu0 0
        %704 = vmatpush1.bf16.msra.mxu0 0
        %705 = vmatprep.mubr.bf16.mxu0 0
        %706 = vmatmul.mubr.bf16.gmra.mrb[0].mxu0 %v671
        %v707 = vpop.f32.mrb[0].mxu0
        %v708 = vadd.f32 0.0, %v707
        %v709 = vpop.f32.mrb[0].mxu0
        %v710 = vadd.f32 0.0, %v709
        %v711 = vpop.f32.mrb[0].mxu0
        %v712 = vadd.f32 0.0, %v711
        %v713 = vpop.f32.mrb[0].mxu0
        %v714 = vadd.f32 0.0, %v713
        %715 = vdwg.mxu0
        %v716 = vtanh.pop %v708
        %v717 = vtanh.pop %v710
        %v718 = vmul.f32 %v712, 0.5
        %v719 = vmul.f32 %v714, 0.5
        %v720 = vtanh.pop %v718
        %v721 = vtanh.pop %v719
        %v722 = vadd.f32 %v720, 1.0
        %v723 = vadd.f32 %v721, 1.0
        %v724 = vmul.f32 %v722, 0.5
        %v725 = vmul.f32 %v723, 0.5
        %v726 = vmul.f32 %v716, %v724
        %v727 = vmul.f32 %v717, %v725
        %v728 = vpack.c.bf16 %v726, %v726
        %v729 = vpack.c.bf16 %v727, %v727
        %v733 = vunpack.c.l.b16 %v653
        %v734 = vunpack.c.l.b16 %v654
        %v735 = vunpack.c.l.b16 %v655
        %v736 = vpack.c.b16 %v734, %v733
        %v737 = vpack.c.b16 %v735, %v735
        %v739 = vsel %vm430, %v736, 0
        %v742 = vsel %vm430, %v737, 0
        %v745 = vsel %vm437, %v728, 0
        %v748 = vsel %vm437, %v729, 0
        %750 = vmatprep.subr.bf16.mxu0 %v748
        %751 = vmatpush1.bf16.msra.mxu0 %v745
        %752 = vmatprep.subr.bf16.mxu0 0
        %753 = vmatpush1.bf16.msra.mxu0 0
        %754 = vmatprep.subr.bf16.mxu0 0
        %755 = vmatpush1.bf16.msra.mxu0 0
        %756 = vmatprep.subr.bf16.mxu0 0
        %757 = vmatpush1.bf16.msra.mxu0 0
        %758 = vmatprep.subr.bf16.mxu0 0
        %759 = vmatpush1.bf16.msra.mxu0 0
        %760 = vmatprep.subr.bf16.mxu0 0
        %761 = vmatpush1.bf16.msra.mxu0 0
        %762 = vmatprep.subr.bf16.mxu0 0
        %763 = vmatpush1.bf16.msra.mxu0 0
        %764 = vmatprep.subr.bf16.mxu0 0
        %765 = vmatpush1.bf16.msra.mxu0 0
        %766 = vmatprep.subr.bf16.mxu0 0
        %767 = vmatpush1.bf16.msra.mxu0 0
        %768 = vmatprep.subr.bf16.mxu0 0
        %769 = vmatpush1.bf16.msra.mxu0 0
        %770 = vmatprep.subr.bf16.mxu0 0
        %771 = vmatpush1.bf16.msra.mxu0 0
        %772 = vmatprep.subr.bf16.mxu0 0
        %773 = vmatpush1.bf16.msra.mxu0 0
        %774 = vmatprep.subr.bf16.mxu0 0
        %775 = vmatpush1.bf16.msra.mxu0 0
        %776 = vmatprep.subr.bf16.mxu0 0
        %777 = vmatpush1.bf16.msra.mxu0 0
        %778 = vmatprep.subr.bf16.mxu0 0
        %779 = vmatpush1.bf16.msra.mxu0 0
        %780 = vmatprep.subr.bf16.mxu0 0
        %781 = vmatpush1.bf16.msra.mxu0 0
        %782 = vmatprep.mubr.bf16.mxu0 0
        %783 = vmatmul.mubr.bf16.gmra.mrb[0].mxu0 %v739
        %v784 = vpop.f32.mrb[0].mxu0
        %v785 = vadd.f32 0.0, %v784
        %v786 = vpop.f32.mrb[0].mxu0
        %v787 = vadd.f32 0.0, %v786
        %v788 = vpop.f32.mrb[0].mxu0
        %v789 = vpop.f32.mrb[0].mxu0
        %v790 = vadd.f32 0.0, %v789
        %791 = vmatprep.mubr.bf16.mxu0 0
        %792 = vmatmul.mubr.bf16.gmra.mrb[0].mxu0 %v742
        %v793 = vpop.f32.mrb[0].mxu0
        %v794 = vpop.f32.mrb[0].mxu0
        %v795 = vadd.f32 0.0, %v794
        %v796 = vpop.f32.mrb[0].mxu0
        %v797 = vpop.f32.mrb[0].mxu0
        %798 = vdwg.mxu0
        %v799 = vadd.f32 %v645, %v785
        %v800 = vadd.f32 %v646, %v787
        %v801 = vadd.f32 %v647, %v790
        %v802 = vadd.f32 %v648, %v795
        %s803 = scalar_lea.vmem %s2, 24
        %v804 = vld [vmem:[%s803] sm:$0xf]
        %v805 = vld [vmem:[%s803 + $0x4] sm:$0xf]
        %s806 = scalar_lea.vmem %s3, 36
        %v807 = vld [vmem:[%s806] sm:$0xf]
        %v808 = vld [vmem:[%s806 + $0x4] sm:$0xf]
        %v809 = vld [vmem:[%s806 + $0x8] sm:$0xf]
        %810 = vrot.lane.b32.xlu0 %v799, 1
        %v811 = vpop.permute.xlu0 %810
        %812 = vrot.lane.b32.xlu0 %v800, 1
        %v813 = vpop.permute.xlu0 %812
        %v814 = vsel %vm351, %v811, %v813
        %v815 = vsel %vm351, %v813, %v811
        %v816 = vpack.c.bf16 %v799, %v815
        %v817 = vpack.c.bf16 %v800, %v814
        %v820 = vunpack.c.l.b16 %v804
        %v821 = vunpack.c.l.b16 %v805
        %v822 = vpack.c.b16 %v821, %v820
        %v824 = vsel %vm361, %v822, 0
        %826 = vmatprep.subr.bf16.mxu0 %v817
        %827 = vmatpush1.bf16.msra.mxu0 %v816
        %828 = vmatprep.subr.bf16.mxu0 0
        %829 = vmatpush1.bf16.msra.mxu0 0
        %830 = vmatprep.subr.bf16.mxu0 0
        %831 = vmatpush1.bf16.msra.mxu0 0
        %832 = vmatprep.subr.bf16.mxu0 0
        %833 = vmatpush1.bf16.msra.mxu0 0
        %834 = vmatprep.subr.bf16.mxu0 0
        %835 = vmatpush1.bf16.msra.mxu0 0
        %836 = vmatprep.subr.bf16.mxu0 0
        %837 = vmatpush1.bf16.msra.mxu0 0
        %838 = vmatprep.subr.bf16.mxu0 0
        %839 = vmatpush1.bf16.msra.mxu0 0
        %840 = vmatprep.subr.bf16.mxu0 0
        %841 = vmatpush1.bf16.msra.mxu0 0
        %842 = vmatprep.subr.bf16.mxu0 0
        %843 = vmatpush1.bf16.msra.mxu0 0
        %844 = vmatprep.subr.bf16.mxu0 0
        %845 = vmatpush1.bf16.msra.mxu0 0
        %846 = vmatprep.subr.bf16.mxu0 0
        %847 = vmatpush1.bf16.msra.mxu0 0
        %848 = vmatprep.subr.bf16.mxu0 0
        %849 = vmatpush1.bf16.msra.mxu0 0
        %850 = vmatprep.subr.bf16.mxu0 0
        %851 = vmatpush1.bf16.msra.mxu0 0
        %852 = vmatprep.subr.bf16.mxu0 0
        %853 = vmatpush1.bf16.msra.mxu0 0
        %854 = vmatprep.subr.bf16.mxu0 0
        %855 = vmatpush1.bf16.msra.mxu0 0
        %856 = vmatprep.subr.bf16.mxu0 0
        %857 = vmatpush1.bf16.msra.mxu0 0
        %858 = vmatprep.mubr.bf16.mxu0 0
        %859 = vmatmul.mubr.bf16.gmra.mrb[0].mxu0 %v824
        %v860 = vpop.f32.mrb[0].mxu0
        %v861 = vadd.f32 0.0, %v860
        %v862 = vpop.f32.mrb[0].mxu0
        %v863 = vadd.f32 0.0, %v862
        %v864 = vpop.f32.mrb[0].mxu0
        %v865 = vadd.f32 0.0, %v864
        %v866 = vpop.f32.mrb[0].mxu0
        %v867 = vadd.f32 0.0, %v866
        %868 = vdwg.mxu0
        %v869 = vtanh.pop %v861
        %v870 = vtanh.pop %v863
        %v871 = vmul.f32 %v865, 0.5
        %v872 = vmul.f32 %v867, 0.5
        %v873 = vtanh.pop %v871
        %v874 = vtanh.pop %v872
        %v875 = vadd.f32 %v873, 1.0
        %v876 = vadd.f32 %v874, 1.0
        %v877 = vmul.f32 %v875, 0.5
        %v878 = vmul.f32 %v876, 0.5
        %v879 = vmul.f32 %v869, %v877
        %v880 = vmul.f32 %v870, %v878
        %v881 = vpack.c.bf16 %v879, %v879
        %v882 = vpack.c.bf16 %v880, %v880
        %v886 = vunpack.c.l.b16 %v807
        %v887 = vunpack.c.l.b16 %v808
        %v888 = vunpack.c.l.b16 %v809
        %v889 = vpack.c.b16 %v887, %v886
        %v890 = vpack.c.b16 %v888, %v888
        %v892 = vsel %vm430, %v889, 0
        %v895 = vsel %vm430, %v890, 0
        %v898 = vsel %vm437, %v881, 0
        %v901 = vsel %vm437, %v882, 0
        %903 = vmatprep.subr.bf16.mxu0 %v901
        %904 = vmatpush1.bf16.msra.mxu0 %v898
        %905 = vmatprep.subr.bf16.mxu0 0
        %906 = vmatpush1.bf16.msra.mxu0 0
        %907 = vmatprep.subr.bf16.mxu0 0
        %908 = vmatpush1.bf16.msra.mxu0 0
        %909 = vmatprep.subr.bf16.mxu0 0
        %910 = vmatpush1.bf16.msra.mxu0 0
        %911 = vmatprep.subr.bf16.mxu0 0
        %912 = vmatpush1.bf16.msra.mxu0 0
        %913 = vmatprep.subr.bf16.mxu0 0
        %914 = vmatpush1.bf16.msra.mxu0 0
        %915 = vmatprep.subr.bf16.mxu0 0
        %916 = vmatpush1.bf16.msra.mxu0 0
        %917 = vmatprep.subr.bf16.mxu0 0
        %918 = vmatpush1.bf16.msra.mxu0 0
        %919 = vmatprep.subr.bf16.mxu0 0
        %920 = vmatpush1.bf16.msra.mxu0 0
        %921 = vmatprep.subr.bf16.mxu0 0
        %922 = vmatpush1.bf16.msra.mxu0 0
        %923 = vmatprep.subr.bf16.mxu0 0
        %924 = vmatpush1.bf16.msra.mxu0 0
        %925 = vmatprep.subr.bf16.mxu0 0
        %926 = vmatpush1.bf16.msra.mxu0 0
        %927 = vmatprep.subr.bf16.mxu0 0
        %928 = vmatpush1.bf16.msra.mxu0 0
        %929 = vmatprep.subr.bf16.mxu0 0
        %930 = vmatpush1.bf16.msra.mxu0 0
        %931 = vmatprep.subr.bf16.mxu0 0
        %932 = vmatpush1.bf16.msra.mxu0 0
        %933 = vmatprep.subr.bf16.mxu0 0
        %934 = vmatpush1.bf16.msra.mxu0 0
        %935 = vmatprep.mubr.bf16.mxu0 0
        %936 = vmatmul.mubr.bf16.gmra.mrb[0].mxu0 %v892
        %v937 = vpop.f32.mrb[0].mxu0
        %v938 = vadd.f32 0.0, %v937
        %v939 = vpop.f32.mrb[0].mxu0
        %v940 = vadd.f32 0.0, %v939
        %v941 = vpop.f32.mrb[0].mxu0
        %v942 = vpop.f32.mrb[0].mxu0
        %v943 = vadd.f32 0.0, %v942
        %944 = vmatprep.mubr.bf16.mxu0 0
        %945 = vmatmul.mubr.bf16.gmra.mrb[0].mxu0 %v895
        %v946 = vpop.f32.mrb[0].mxu0
        %v947 = vpop.f32.mrb[0].mxu0
        %v948 = vadd.f32 0.0, %v947
        %v949 = vpop.f32.mrb[0].mxu0
        %v950 = vpop.f32.mrb[0].mxu0
        %951 = vdwg.mxu0
        %v952 = vadd.f32 %v799, %v938
        %v953 = vadd.f32 %v800, %v940
        %v954 = vadd.f32 %v801, %v943
        %v955 = vadd.f32 %v802, %v948
        %s956 = scalar_lea.vmem %s2, 32
        %v957 = vld [vmem:[%s956] sm:$0xf]
        %v958 = vld [vmem:[%s956 + $0x4] sm:$0xf]
        %s959 = scalar_lea.vmem %s3, 48
        %v960 = vld [vmem:[%s959] sm:$0xf]
        %v961 = vld [vmem:[%s959 + $0x4] sm:$0xf]
        %v962 = vld [vmem:[%s959 + $0x8] sm:$0xf]
        %963 = vrot.lane.b32.xlu0 %v952, 2
        %v964 = vpop.permute.xlu0 %963
        %965 = vrot.lane.b32.xlu0 %v953, 2
        %v966 = vpop.permute.xlu0 %965
        %v967 = vsel %vm506, %v964, %v966
        %v968 = vsel %vm506, %v966, %v964
        %v969 = vpack.c.bf16 %v952, %v968
        %v970 = vpack.c.bf16 %v953, %v967
        %v973 = vunpack.c.l.b16 %v957
        %v974 = vunpack.c.l.b16 %v958
        %v975 = vpack.c.b16 %v974, %v973
        %v977 = vsel %vm361, %v975, 0
        %979 = vmatprep.subr.bf16.mxu0 %v970
        %980 = vmatpush1.bf16.msra.mxu0 %v969
        %981 = vmatprep.subr.bf16.mxu0 0
        %982 = vmatpush1.bf16.msra.mxu0 0
        %983 = vmatprep.subr.bf16.mxu0 0
        %984 = vmatpush1.bf16.msra.mxu0 0
        %985 = vmatprep.subr.bf16.mxu0 0
        %986 = vmatpush1.bf16.msra.mxu0 0
        %987 = vmatprep.subr.bf16.mxu0 0
        %988 = vmatpush1.bf16.msra.mxu0 0
        %989 = vmatprep.subr.bf16.mxu0 0
        %990 = vmatpush1.bf16.msra.mxu0 0
        %991 = vmatprep.subr.bf16.mxu0 0
        %992 = vmatpush1.bf16.msra.mxu0 0
        %993 = vmatprep.subr.bf16.mxu0 0
        %994 = vmatpush1.bf16.msra.mxu0 0
        %995 = vmatprep.subr.bf16.mxu0 0
        %996 = vmatpush1.bf16.msra.mxu0 0
        %997 = vmatprep.subr.bf16.mxu0 0
        %998 = vmatpush1.bf16.msra.mxu0 0
        %999 = vmatprep.subr.bf16.mxu0 0
        %1000 = vmatpush1.bf16.msra.mxu0 0
        %1001 = vmatprep.subr.bf16.mxu0 0
        %1002 = vmatpush1.bf16.msra.mxu0 0
        %1003 = vmatprep.subr.bf16.mxu0 0
        %1004 = vmatpush1.bf16.msra.mxu0 0
        %1005 = vmatprep.subr.bf16.mxu0 0
        %1006 = vmatpush1.bf16.msra.mxu0 0
        %1007 = vmatprep.subr.bf16.mxu0 0
        %1008 = vmatpush1.bf16.msra.mxu0 0
        %1009 = vmatprep.subr.bf16.mxu0 0
        %1010 = vmatpush1.bf16.msra.mxu0 0
        %1011 = vmatprep.mubr.bf16.mxu0 0
        %1012 = vmatmul.mubr.bf16.gmra.mrb[0].mxu0 %v977
        %v1013 = vpop.f32.mrb[0].mxu0
        %v1014 = vadd.f32 0.0, %v1013
        %v1015 = vpop.f32.mrb[0].mxu0
        %v1016 = vadd.f32 0.0, %v1015
        %v1017 = vpop.f32.mrb[0].mxu0
        %v1018 = vadd.f32 0.0, %v1017
        %v1019 = vpop.f32.mrb[0].mxu0
        %v1020 = vadd.f32 0.0, %v1019
        %1021 = vdwg.mxu0
        %v1022 = vtanh.pop %v1014
        %v1023 = vtanh.pop %v1016
        %v1024 = vmul.f32 %v1018, 0.5
        %v1025 = vmul.f32 %v1020, 0.5
        %v1026 = vtanh.pop %v1024
        %v1027 = vtanh.pop %v1025
        %v1028 = vadd.f32 %v1026, 1.0
        %v1029 = vadd.f32 %v1027, 1.0
        %v1030 = vmul.f32 %v1028, 0.5
        %v1031 = vmul.f32 %v1029, 0.5
        %v1032 = vmul.f32 %v1022, %v1030
        %v1033 = vmul.f32 %v1023, %v1031
        %v1034 = vpack.c.bf16 %v1032, %v1032
        %v1035 = vpack.c.bf16 %v1033, %v1033
        %v1039 = vunpack.c.l.b16 %v960
        %v1040 = vunpack.c.l.b16 %v961
        %v1041 = vunpack.c.l.b16 %v962
        %v1042 = vpack.c.b16 %v1040, %v1039
        %v1043 = vpack.c.b16 %v1041, %v1041
        %v1045 = vsel %vm430, %v1042, 0
        %v1048 = vsel %vm430, %v1043, 0
        %v1051 = vsel %vm437, %v1034, 0
        %v1054 = vsel %vm437, %v1035, 0
        %1056 = vmatprep.subr.bf16.mxu0 %v1054
        %1057 = vmatpush1.bf16.msra.mxu0 %v1051
        %1058 = vmatprep.subr.bf16.mxu0 0
        %1059 = vmatpush1.bf16.msra.mxu0 0
        %1060 = vmatprep.subr.bf16.mxu0 0
        %1061 = vmatpush1.bf16.msra.mxu0 0
        %1062 = vmatprep.subr.bf16.mxu0 0
        %1063 = vmatpush1.bf16.msra.mxu0 0
        %1064 = vmatprep.subr.bf16.mxu0 0
        %1065 = vmatpush1.bf16.msra.mxu0 0
        %1066 = vmatprep.subr.bf16.mxu0 0
        %1067 = vmatpush1.bf16.msra.mxu0 0
        %1068 = vmatprep.subr.bf16.mxu0 0
        %1069 = vmatpush1.bf16.msra.mxu0 0
        %1070 = vmatprep.subr.bf16.mxu0 0
        %1071 = vmatpush1.bf16.msra.mxu0 0
        %1072 = vmatprep.subr.bf16.mxu0 0
        %1073 = vmatpush1.bf16.msra.mxu0 0
        %1074 = vmatprep.subr.bf16.mxu0 0
        %1075 = vmatpush1.bf16.msra.mxu0 0
        %1076 = vmatprep.subr.bf16.mxu0 0
        %1077 = vmatpush1.bf16.msra.mxu0 0
        %1078 = vmatprep.subr.bf16.mxu0 0
        %1079 = vmatpush1.bf16.msra.mxu0 0
        %1080 = vmatprep.subr.bf16.mxu0 0
        %1081 = vmatpush1.bf16.msra.mxu0 0
        %1082 = vmatprep.subr.bf16.mxu0 0
        %1083 = vmatpush1.bf16.msra.mxu0 0
        %1084 = vmatprep.subr.bf16.mxu0 0
        %1085 = vmatpush1.bf16.msra.mxu0 0
        %1086 = vmatprep.subr.bf16.mxu0 0
        %1087 = vmatpush1.bf16.msra.mxu0 0
        %1088 = vmatprep.mubr.bf16.mxu0 0
        %1089 = vmatmul.mubr.bf16.gmra.mrb[0].mxu0 %v1045
        %v1090 = vpop.f32.mrb[0].mxu0
        %v1091 = vadd.f32 0.0, %v1090
        %v1092 = vpop.f32.mrb[0].mxu0
        %v1093 = vadd.f32 0.0, %v1092
        %v1094 = vpop.f32.mrb[0].mxu0
        %v1095 = vpop.f32.mrb[0].mxu0
        %v1096 = vadd.f32 0.0, %v1095
        %1097 = vmatprep.mubr.bf16.mxu0 0
        %1098 = vmatmul.mubr.bf16.gmra.mrb[0].mxu0 %v1048
        %v1099 = vpop.f32.mrb[0].mxu0
        %v1100 = vpop.f32.mrb[0].mxu0
        %v1101 = vadd.f32 0.0, %v1100
        %v1102 = vpop.f32.mrb[0].mxu0
        %v1103 = vpop.f32.mrb[0].mxu0
        %1104 = vdwg.mxu0
        %v1105 = vadd.f32 %v952, %v1091
        %v1106 = vadd.f32 %v953, %v1093
        %v1107 = vadd.f32 %v954, %v1096
        %v1108 = vadd.f32 %v955, %v1101
        %s1109 = scalar_lea.vmem %s2, 40
        %v1110 = vld [vmem:[%s1109] sm:$0xf]
        %v1111 = vld [vmem:[%s1109 + $0x4] sm:$0xf]
        %s1112 = scalar_lea.vmem %s3, 60
        %v1113 = vld [vmem:[%s1112] sm:$0xf]
        %v1114 = vld [vmem:[%s1112 + $0x4] sm:$0xf]
        %v1115 = vld [vmem:[%s1112 + $0x8] sm:$0xf]
        %1116 = vrot.lane.b32.xlu0 %v1105, 4
        %v1117 = vpop.permute.xlu0 %1116
        %1118 = vrot.lane.b32.xlu0 %v1106, 4
        %v1119 = vpop.permute.xlu0 %1118
        %v1120 = vsel %vm660, %v1117, %v1119
        %v1121 = vsel %vm660, %v1119, %v1117
        %v1122 = vpack.c.bf16 %v1105, %v1121
        %v1123 = vpack.c.bf16 %v1106, %v1120
        %v1126 = vunpack.c.l.b16 %v1110
        %v1127 = vunpack.c.l.b16 %v1111
        %v1128 = vpack.c.b16 %v1127, %v1126
        %v1130 = vsel %vm361, %v1128, 0
        %1132 = vmatprep.subr.bf16.mxu0 %v1123
        %1133 = vmatpush1.bf16.msra.mxu0 %v1122
        %1134 = vmatprep.subr.bf16.mxu0 0
        %1135 = vmatpush1.bf16.msra.mxu0 0
        %1136 = vmatprep.subr.bf16.mxu0 0
        %1137 = vmatpush1.bf16.msra.mxu0 0
        %1138 = vmatprep.subr.bf16.mxu0 0
        %1139 = vmatpush1.bf16.msra.mxu0 0
        %1140 = vmatprep.subr.bf16.mxu0 0
        %1141 = vmatpush1.bf16.msra.mxu0 0
        %1142 = vmatprep.subr.bf16.mxu0 0
        %1143 = vmatpush1.bf16.msra.mxu0 0
        %1144 = vmatprep.subr.bf16.mxu0 0
        %1145 = vmatpush1.bf16.msra.mxu0 0
        %1146 = vmatprep.subr.bf16.mxu0 0
        %1147 = vmatpush1.bf16.msra.mxu0 0
        %1148 = vmatprep.subr.bf16.mxu0 0
        %1149 = vmatpush1.bf16.msra.mxu0 0
        %1150 = vmatprep.subr.bf16.mxu0 0
        %1151 = vmatpush1.bf16.msra.mxu0 0
        %1152 = vmatprep.subr.bf16.mxu0 0
        %1153 = vmatpush1.bf16.msra.mxu0 0
        %1154 = vmatprep.subr.bf16.mxu0 0
        %1155 = vmatpush1.bf16.msra.mxu0 0
        %1156 = vmatprep.subr.bf16.mxu0 0
        %1157 = vmatpush1.bf16.msra.mxu0 0
        %1158 = vmatprep.subr.bf16.mxu0 0
        %1159 = vmatpush1.bf16.msra.mxu0 0
        %1160 = vmatprep.subr.bf16.mxu0 0
        %1161 = vmatpush1.bf16.msra.mxu0 0
        %1162 = vmatprep.subr.bf16.mxu0 0
        %1163 = vmatpush1.bf16.msra.mxu0 0
        %1164 = vmatprep.mubr.bf16.mxu0 0
        %1165 = vmatmul.mubr.bf16.gmra.mrb[0].mxu0 %v1130
        %v1166 = vpop.f32.mrb[0].mxu0
        %v1167 = vadd.f32 0.0, %v1166
        %v1168 = vpop.f32.mrb[0].mxu0
        %v1169 = vadd.f32 0.0, %v1168
        %v1170 = vpop.f32.mrb[0].mxu0
        %v1171 = vadd.f32 0.0, %v1170
        %v1172 = vpop.f32.mrb[0].mxu0
        %v1173 = vadd.f32 0.0, %v1172
        %1174 = vdwg.mxu0
        %v1175 = vtanh.pop %v1167
        %v1176 = vtanh.pop %v1169
        %v1177 = vmul.f32 %v1171, 0.5
        %v1178 = vmul.f32 %v1173, 0.5
        %v1179 = vtanh.pop %v1177
        %v1180 = vtanh.pop %v1178
        %v1181 = vadd.f32 %v1179, 1.0
        %v1182 = vadd.f32 %v1180, 1.0
        %v1183 = vmul.f32 %v1181, 0.5
        %v1184 = vmul.f32 %v1182, 0.5
        %v1185 = vmul.f32 %v1175, %v1183
        %v1186 = vmul.f32 %v1176, %v1184
        %v1187 = vpack.c.bf16 %v1185, %v1185
        %v1188 = vpack.c.bf16 %v1186, %v1186
        %v1192 = vunpack.c.l.b16 %v1113
        %v1193 = vunpack.c.l.b16 %v1114
        %v1194 = vunpack.c.l.b16 %v1115
        %v1195 = vpack.c.b16 %v1193, %v1192
        %v1196 = vpack.c.b16 %v1194, %v1194
        %v1198 = vsel %vm430, %v1195, 0
        %v1201 = vsel %vm430, %v1196, 0
        %v1204 = vsel %vm437, %v1187, 0
        %v1207 = vsel %vm437, %v1188, 0
        %1209 = vmatprep.subr.bf16.mxu0 %v1207
        %1210 = vmatpush1.bf16.msra.mxu0 %v1204
        %1211 = vmatprep.subr.bf16.mxu0 0
        %1212 = vmatpush1.bf16.msra.mxu0 0
        %1213 = vmatprep.subr.bf16.mxu0 0
        %1214 = vmatpush1.bf16.msra.mxu0 0
        %1215 = vmatprep.subr.bf16.mxu0 0
        %1216 = vmatpush1.bf16.msra.mxu0 0
        %1217 = vmatprep.subr.bf16.mxu0 0
        %1218 = vmatpush1.bf16.msra.mxu0 0
        %1219 = vmatprep.subr.bf16.mxu0 0
        %1220 = vmatpush1.bf16.msra.mxu0 0
        %1221 = vmatprep.subr.bf16.mxu0 0
        %1222 = vmatpush1.bf16.msra.mxu0 0
        %1223 = vmatprep.subr.bf16.mxu0 0
        %1224 = vmatpush1.bf16.msra.mxu0 0
        %1225 = vmatprep.subr.bf16.mxu0 0
        %1226 = vmatpush1.bf16.msra.mxu0 0
        %1227 = vmatprep.subr.bf16.mxu0 0
        %1228 = vmatpush1.bf16.msra.mxu0 0
        %1229 = vmatprep.subr.bf16.mxu0 0
        %1230 = vmatpush1.bf16.msra.mxu0 0
        %1231 = vmatprep.subr.bf16.mxu0 0
        %1232 = vmatpush1.bf16.msra.mxu0 0
        %1233 = vmatprep.subr.bf16.mxu0 0
        %1234 = vmatpush1.bf16.msra.mxu0 0
        %1235 = vmatprep.subr.bf16.mxu0 0
        %1236 = vmatpush1.bf16.msra.mxu0 0
        %1237 = vmatprep.subr.bf16.mxu0 0
        %1238 = vmatpush1.bf16.msra.mxu0 0
        %1239 = vmatprep.subr.bf16.mxu0 0
        %1240 = vmatpush1.bf16.msra.mxu0 0
        %1241 = vmatprep.mubr.bf16.mxu0 0
        %1242 = vmatmul.mubr.bf16.gmra.mrb[0].mxu0 %v1198
        %v1243 = vpop.f32.mrb[0].mxu0
        %v1244 = vpop.f32.mrb[0].mxu0
        %v1245 = vpop.f32.mrb[0].mxu0
        %v1246 = vpop.f32.mrb[0].mxu0
        %v1247 = vadd.f32 0.0, %v1246
        %1248 = vmatprep.mubr.bf16.mxu0 0
        %1249 = vmatmul.mubr.bf16.gmra.mrb[0].mxu0 %v1201
        %v1250 = vpop.f32.mrb[0].mxu0
        %v1251 = vpop.f32.mrb[0].mxu0
        %v1252 = vadd.f32 0.0, %v1251
        %v1253 = vpop.f32.mrb[0].mxu0
        %v1254 = vpop.f32.mrb[0].mxu0
        %1255 = vdwg.mxu0
        %v1256 = vadd.f32 %v1107, %v1247
        %v1257 = vadd.f32 %v1108, %v1252
        %v1258 = vmax.f32 %v1256, 0.0
        %v1259 = vmax.f32 %v1257, 0.0
        %v1260 = vld [vmem:[%s4] sm:$0xf]
        %v1261 = vld [vmem:[%s4 + $0x4] sm:$0xf]
        %v1262 = vpack.c.bf16 %v1259, %v1258
        %v1263 = vld [vmem:[%s5] sm:$0xff]
        %v1264 = vld [vmem:[%s5 + $0x8] sm:$0xff]
        %1266 = vset.pattern.permute.xlu0 0
        %1267 = vperm.xlu0 %1266, %v1263
        %v1268 = vpop.permute.xlu0 %1267
        %1271 = vset.pattern.permute.xlu0 0
        %1272 = vperm.xlu0 %1271, %v1264
        %v1273 = vpop.permute.xlu0 %1272
        %v1277 = vunpack.c.l.b16 %v1260
        %v1278 = vunpack.c.l.b16 %v1261
        %v1279 = vpack.c.b16 %v1278, %v1277
        %v1281 = vsel %vm361, %v1279, 0
        %1283 = vmatprep.subr.bf16.mxu0 0
        %1284 = vmatpush1.bf16.msra.mxu0 %v1262
        %1285 = vmatprep.subr.bf16.mxu0 0
        %1286 = vmatpush1.bf16.msra.mxu0 0
        %1287 = vmatprep.subr.bf16.mxu0 0
        %1288 = vmatpush1.bf16.msra.mxu0 0
        %1289 = vmatprep.subr.bf16.mxu0 0
        %1290 = vmatpush1.bf16.msra.mxu0 0
        %1291 = vmatprep.subr.bf16.mxu0 0
        %1292 = vmatpush1.bf16.msra.mxu0 0
        %1293 = vmatprep.subr.bf16.mxu0 0
        %1294 = vmatpush1.bf16.msra.mxu0 0
        %1295 = vmatprep.subr.bf16.mxu0 0
        %1296 = vmatpush1.bf16.msra.mxu0 0
        %1297 = vmatprep.subr.bf16.mxu0 0
        %1298 = vmatpush1.bf16.msra.mxu0 0
        %1299 = vmatprep.subr.bf16.mxu0 0
        %1300 = vmatpush1.bf16.msra.mxu0 0
        %1301 = vmatprep.subr.bf16.mxu0 0
        %1302 = vmatpush1.bf16.msra.mxu0 0
        %1303 = vmatprep.subr.bf16.mxu0 0
        %1304 = vmatpush1.bf16.msra.mxu0 0
        %1305 = vmatprep.subr.bf16.mxu0 0
        %1306 = vmatpush1.bf16.msra.mxu0 0
        %1307 = vmatprep.subr.bf16.mxu0 0
        %1308 = vmatpush1.bf16.msra.mxu0 0
        %1309 = vmatprep.subr.bf16.mxu0 0
        %1310 = vmatpush1.bf16.msra.mxu0 0
        %1311 = vmatprep.subr.bf16.mxu0 0
        %1312 = vmatpush1.bf16.msra.mxu0 0
        %1313 = vmatprep.subr.bf16.mxu0 0
        %1314 = vmatpush1.bf16.msra.mxu0 0
        %1315 = vmatprep.mubr.bf16.mxu0 0
        %1316 = vmatmul.mubr.bf16.gmra.mrb[0].mxu0 %v1281
        %v1317 = vpop.f32.mrb[0].mxu0
        %v1318 = vadd.f32 %v1268, %v1317
        %v1319 = vpop.f32.mrb[0].mxu0
        %v1320 = vpop.f32.mrb[0].mxu0
        %v1321 = vadd.f32 %v1273, %v1320
        %v1322 = vpop.f32.mrb[0].mxu0
        %1323 = vdwg.mxu0
        %v1324 = vmax.f32 %v1318, 0.0
        %v1325 = vmax.f32 %v1321, 0.0
        %v1326 = vld [vmem:[%s6] sm:$0xf]
        %v1327 = vld [vmem:[%s6 + $0x4] sm:$0xf]
        %v1328 = vpack.c.bf16 %v1325, %v1324
        %v1329 = vld [vmem:[%s7] sm:$0xff]
        %v1330 = vld [vmem:[%s7 + $0x8] sm:$0xff]
        %1332 = vset.pattern.permute.xlu0 0
        %1333 = vperm.xlu0 %1332, %v1329
        %v1334 = vpop.permute.xlu0 %1333
        %1337 = vset.pattern.permute.xlu0 0
        %1338 = vperm.xlu0 %1337, %v1330
        %v1339 = vpop.permute.xlu0 %1338
        %v1343 = vunpack.c.l.b16 %v1326
        %v1344 = vunpack.c.l.b16 %v1327
        %v1345 = vpack.c.b16 %v1344, %v1343
        %v1347 = vsel %vm361, %v1345, 0
        %1349 = vmatprep.subr.bf16.mxu0 0
        %1350 = vmatpush1.bf16.msra.mxu0 %v1328
        %1351 = vmatprep.subr.bf16.mxu0 0
        %1352 = vmatpush1.bf16.msra.mxu0 0
        %1353 = vmatprep.subr.bf16.mxu0 0
        %1354 = vmatpush1.bf16.msra.mxu0 0
        %1355 = vmatprep.subr.bf16.mxu0 0
        %1356 = vmatpush1.bf16.msra.mxu0 0
        %1357 = vmatprep.subr.bf16.mxu0 0
        %1358 = vmatpush1.bf16.msra.mxu0 0
        %1359 = vmatprep.subr.bf16.mxu0 0
        %1360 = vmatpush1.bf16.msra.mxu0 0
        %1361 = vmatprep.subr.bf16.mxu0 0
        %1362 = vmatpush1.bf16.msra.mxu0 0
        %1363 = vmatprep.subr.bf16.mxu0 0
        %1364 = vmatpush1.bf16.msra.mxu0 0
        %1365 = vmatprep.subr.bf16.mxu0 0
        %1366 = vmatpush1.bf16.msra.mxu0 0
        %1367 = vmatprep.subr.bf16.mxu0 0
        %1368 = vmatpush1.bf16.msra.mxu0 0
        %1369 = vmatprep.subr.bf16.mxu0 0
        %1370 = vmatpush1.bf16.msra.mxu0 0
        %1371 = vmatprep.subr.bf16.mxu0 0
        %1372 = vmatpush1.bf16.msra.mxu0 0
        %1373 = vmatprep.subr.bf16.mxu0 0
        %1374 = vmatpush1.bf16.msra.mxu0 0
        %1375 = vmatprep.subr.bf16.mxu0 0
        %1376 = vmatpush1.bf16.msra.mxu0 0
        %1377 = vmatprep.subr.bf16.mxu0 0
        %1378 = vmatpush1.bf16.msra.mxu0 0
        %1379 = vmatprep.subr.bf16.mxu0 0
        %1380 = vmatpush1.bf16.msra.mxu0 0
        %1381 = vmatprep.mubr.bf16.mxu0 0
        %1382 = vmatmul.mubr.bf16.gmra.mrb[0].mxu0 %v1347
        %v1383 = vpop.f32.mrb[0].mxu0
        %v1384 = vadd.f32 %v1334, %v1383
        %v1385 = vpop.f32.mrb[0].mxu0
        %v1386 = vpop.f32.mrb[0].mxu0
        %v1387 = vadd.f32 %v1339, %v1386
        %v1388 = vpop.f32.mrb[0].mxu0
        %1389 = vdwg.mxu0
        %1390 = vst [vmem:[%s310] sm:$0xff] %v1384
        %1391 = vst [vmem:[%s310 + $0x8] sm:$0xff] %v1387
        %s1392 = sand.u32 %s217, 1
        %s1393 = scalar_lea.sflag [#allocation3], %s1392
        %s1394 = sand.u32 %s217, 1
        %s1395 = smul.addr %s1394, 16
        %s1396 = scalar_lea.vmem [#allocation2], %s1395
        // Predicated region
        $region53: #{tpu_custom_call.1} parent=51 // pred_check
          %p1397 = pneg %p227
        $region54: #{tpu_custom_call.1} parent=51 // pred_check_branch
          %1399 = sbr.rel (%p1397) target = $region56
        $region55: #{tpu_custom_call.1} parent=51 // pred_region
          %s1401 = ssub.s32 256, 256
          %1402 = vsyncadd %s1393, %s1401
          %s1403 = smul.addr %s26, 2
          %s1404 = sadd.s32 %s27, %s1403
          %s1405 = smul.addr %s1404, 128
          %s1406 = scalar_lea.hbm %s8, %s1405
          %s1407 = sshll.u32 %s1396, 4
          %s1408 = int_to_ptr.vmem [resolvable:$true] %s1407
          %1413 = dma.vmem_to_hbm [thread:$0]  %s1408, 256, %s1406, %s1393, 128, 128, 8
        $region56: #{tpu_custom_call.1} parent=51 // pred_fallthru
          _
      $region52: #{tpu_custom_call.1} parent=5 // pred_fallthru
        _
      %p1414 = scmp.le.s32.totalorder 2, %s17
      // Predicated region
      $region57: #{tpu_custom_call.1} parent=5 // pred_check
        %p1415 = pneg %p1414
      $region58: #{tpu_custom_call.1} parent=5 // pred_check_branch
        %1417 = sbr.rel (%p1415) target = $region60
      $region59: #{tpu_custom_call.1} parent=5 // pred_region
        %s1418 = ssub.s32 %s17, 2
        // Predicated region
        $region61: #{tpu_custom_call.1} parent=59 // pred_check
          %p1419 = pneg %p233
        $region62: #{tpu_custom_call.1} parent=59 // pred_check_branch
          %1421 = sbr.rel (%p1419) target = $region64
        $region63: #{tpu_custom_call.1} parent=59 // pred_region
          %s1422 = sand.u32 %s218, 1
          %s1423 = scalar_lea.sflag [#allocation3], %s1422
          %s1424 = sand.u32 %s218, 1
          %s1425 = smul.addr %s1424, 16
          %s1426 = scalar_lea.vmem [#allocation2], %s1425
          %1427 = dma.done %s1423, 256
        $region64: #{tpu_custom_call.1} parent=59 // pred_fallthru
          _
      $region60: #{tpu_custom_call.1} parent=5 // pred_fallthru
        _
    $region6: #{tpu_custom_call.1} parent=1 // loop_footer
      %s21 = sadd.s32 1, %s17
    $region7: #{tpu_custom_call.1} parent=1 // loop_footer_branch
      %16 = sbr.rel target = $region3
    $region8: #{tpu_custom_call.1} parent=1 // loop_exit
      _
    %1428 = vsyncpa [#allocation3], 1
    %s1429 = scalar_lea.sflag [#allocation3], 1
    %1430 = vsyncpa %s1429, 1

</llo_original>
